<compile_context>
chip_gen: v7x
topology: tpu7x:2x2x1
jax: 0.10.0
libtpu: 0.0.40
codegen_flags: <defaults>
</compile_context>

<pallas_src>
import functools

import jax
import jax.numpy as jnp
from jax import lax
from jax.experimental import pallas as pl
from jax.experimental.pallas import tpu as pltpu


# ---------------------------------------------------------------------------
# Fused kernel: ids -> (one-hot @ table) embeddings -> MLP -> sigmoid
# ---------------------------------------------------------------------------
def _dnn_kernel(gene_ids_ref, smiles_ids_ref, gtab_ref, stab_ref,
                w1_ref, b1_ref, w2_ref, b2_ref, w3_ref, b3_ref, o_ref, *,
                max_gene_len, max_smiles_len, embed_dim):
    E = embed_dim

    gene_ids = gene_ids_ref[...]        # (Bt, Lg) int32
    smiles_ids = smiles_ids_ref[...]    # (Bt, Ls) int32
    gtab = gtab_ref[...]                # (Vg_pad, E) bf16  (padded rows are zero)
    stab = stab_ref[...]                # (Vs_pad, E) bf16

    bt = gene_ids.shape[0]
    vg = gtab.shape[0]
    vs = stab.shape[0]

    # Hoisted constants / bias broadcasts (read once per grid step, kept (1, N)).
    g_iota = lax.broadcasted_iota(jnp.int32, (1, vg), 1)
    s_iota = lax.broadcasted_iota(jnp.int32, (1, vs), 1)
    b1 = b1_ref[...]                    # (1, 64) f32
    b2 = b2_ref[...]                    # (1, 32) f32
    w3 = w3_ref[...]                    # (1, 32) f32 (lane-dense last-layer weight)
    b3 = b3_ref[...]                    # (1, 1)  f32

    # First linear layer fused with the embedding gather:
    #   combined @ W1 == sum_l  emb[:, l, :] @ W1[l*E:(l+1)*E, :]
    # so we never materialize the flattened/concatenated (Bt, 512) activation.
    acc = jnp.zeros((bt, w1_ref.shape[1]), jnp.float32)

    def add_contrib(ids, iota, table, w1_row_offset, seq_len, acc):
        for l in range(seq_len):
            # One-hot gather: exact row selection, done on the MXU in bf16.
            onehot = (ids[:, l:l + 1] == iota).astype(table.dtype)           # (Bt, V)
            emb = jnp.dot(onehot, table,
                          preferred_element_type=jnp.float32)               # (Bt, E)
            w1_l = w1_ref[w1_row_offset + l * E: w1_row_offset + (l + 1) * E, :]
            acc = acc + jnp.dot(emb.astype(w1_l.dtype), w1_l,
                                preferred_element_type=jnp.float32)          # (Bt, 64)
        return acc

    acc = add_contrib(gene_ids, g_iota, gtab, 0, max_gene_len, acc)
    acc = add_contrib(smiles_ids, s_iota, stab, max_gene_len * E,
                      max_smiles_len, acc)

    # f32 epilogue (bias + ReLU), bf16 only at the MXU boundary.
    h1 = jnp.maximum(acc + b1, 0.0)                                          # (Bt, 64)
    h2 = jnp.dot(h1.astype(w2_ref.dtype), w2_ref[...],
                 preferred_element_type=jnp.float32)
    h2 = jnp.maximum(h2 + b2, 0.0)                                           # (Bt, 32)

    # Last layer (32 -> 1): VPU multiply + cross-lane (XLU) reduce instead of an
    # N=1 MXU matmul.
    logits = jnp.sum(h2 * w3, axis=-1, keepdims=True) + b3                   # (Bt, 1)
    o_ref[...] = jax.nn.sigmoid(logits)


# ---------------------------------------------------------------------------
# Wrapper
# ---------------------------------------------------------------------------
def _pad_rows_to_multiple(x, m):
    r = (-x.shape[0]) % m
    if r == 0:
        return x
    return jnp.pad(x, ((0, r), (0, 0)))


def dnn_forward(params, gene_input, smiles_input, *, batch_tile=256):
    B, Lg = gene_input.shape
    Ls = smiles_input.shape[1]
    E = params["gene_emb"].shape[1]

    # Batch tile: largest of (<=256) that is legal; pad batch to a multiple of it.
    bt = min(batch_tile, B)
    Bp = ((B + bt - 1) // bt) * bt
    gene_ids = gene_input.astype(jnp.int32)
    smiles_ids = smiles_input.astype(jnp.int32)
    if Bp != B:
        gene_ids = jnp.pad(gene_ids, ((0, Bp - B), (0, 0)))
        smiles_ids = jnp.pad(smiles_ids, ((0, Bp - B), (0, 0)))

    # bf16 at the MXU boundary; pad vocab rows to a sublane multiple (padded rows
    # are zero and can never be selected since ids < vocab_size).
    gtab = _pad_rows_to_multiple(params["gene_emb"], 8).astype(jnp.bfloat16)
    stab = _pad_rows_to_multiple(params["smiles_emb"], 8).astype(jnp.bfloat16)
    w1 = params["w1"].astype(jnp.bfloat16)     # (Lg+Ls)*E x 64
    w2 = params["w2"].astype(jnp.bfloat16)     # 64 x 32
    b1, b2, w3, b3 = params["b1"], params["b2"], params["w3"], params["b3"]

    kernel = functools.partial(_dnn_kernel, max_gene_len=Lg,
                               max_smiles_len=Ls, embed_dim=E)

    def resident(a):  # weights / tables: same block every grid step -> stay in VMEM
        return pl.BlockSpec(a.shape, lambda i: (0,) * a.ndim)

    # TODO(synk): for very large B, pad the output to a lane-dense (Bp, 128) slab
    # to avoid masked 1-wide stores; irrelevant at small batches.
    out = pl.pallas_call(
        kernel,
        out_shape=jax.ShapeDtypeStruct((Bp, 1), jnp.float32),
        grid=(Bp // bt,),
        in_specs=[
            pl.BlockSpec((bt, Lg), lambda i: (i, 0)),
            pl.BlockSpec((bt, Ls), lambda i: (i, 0)),
            resident(gtab), resident(stab),
            resident(w1), resident(b1),
            resident(w2), resident(b2),
            resident(w3), resident(b3),
        ],
        out_specs=pl.BlockSpec((bt, 1), lambda i: (i, 0)),
        compiler_params=pltpu.CompilerParams(
            dimension_semantics=("parallel",)),
    )(gene_ids, smiles_ids, gtab, stab, w1, b1, w2, b2, w3, b3)

    if Bp != B:
        out = out[:B]
    return out


# ---------------------------------------------------------------------------
# Parameter init (matches PyTorch defaults: Embedding ~ N(0,1),
# Linear ~ U(+-1/sqrt(fan_in)))
# ---------------------------------------------------------------------------
def init_params(key, gene_vocab_size, smiles_vocab_size, max_gene_len,
                max_smiles_len, embed_dim=32):
    input_dim = (max_gene_len + max_smiles_len) * embed_dim
    ks = jax.random.split(key, 8)

    def linear_init(kw, kb, fan_in, fan_out):
        bound = 1.0 / jnp.sqrt(fan_in)
        w = jax.random.uniform(kw, (fan_in, fan_out), jnp.float32, -bound, bound)
        b = jax.random.uniform(kb, (1, fan_out), jnp.float32, -bound, bound)
        return w, b

    w1, b1 = linear_init(ks[2], ks[3], input_dim, 64)
    w2, b2 = linear_init(ks[4], ks[5], 64, 32)
    bound3 = 1.0 / jnp.sqrt(32.0)
    w3 = jax.random.uniform(ks[6], (1, 32), jnp.float32, -bound3, bound3)  # (out=1, in=32)
    b3 = jax.random.uniform(ks[7], (1, 1), jnp.float32, -bound3, bound3)
    return {
        "gene_emb": jax.random.normal(ks[0], (gene_vocab_size, embed_dim), jnp.float32),
        "smiles_emb": jax.random.normal(ks[1], (smiles_vocab_size, embed_dim), jnp.float32),
        "w1": w1, "b1": b1,
        "w2": w2, "b2": b2,
        "w3": w3, "b3": b3,
    }


# Pure-JAX reference (f32) for a correctness check.
def reference_forward(params, gene_input, smiles_input):
    B = gene_input.shape[0]
    g = jnp.take(params["gene_emb"], gene_input, axis=0).reshape(B, -1)
    s = jnp.take(params["smiles_emb"], smiles_input, axis=0).reshape(B, -1)
    x = jnp.concatenate([g, s], axis=-1).astype(jnp.float32)
    h1 = jnp.maximum(x @ params["w1"] + params["b1"], 0.0)
    h2 = jnp.maximum(h1 @ params["w2"] + params["b2"], 0.0)
    logits = h2 @ params["w3"].T + params["b3"]
    return jax.nn.sigmoid(logits)


if __name__ == "__main__":
    batch = 8
    gene_vocab_size = 20
    smiles_vocab_size = 40
    max_gene_len = 8
    max_smiles_len = 8
    embed_dim = 32

    key = jax.random.PRNGKey(0)
    k_params, k_gene, k_smiles = jax.random.split(key, 3)

    params = init_params(k_params, gene_vocab_size, smiles_vocab_size,
                         max_gene_len, max_smiles_len, embed_dim)

    gene_input = jax.random.randint(k_gene, (batch, max_gene_len), 0,
                                    gene_vocab_size, dtype=jnp.int32)
    smiles_input = jax.random.randint(k_smiles, (batch, max_smiles_len), 0,
                                      smiles_vocab_size, dtype=jnp.int32)

    out = jax.jit(dnn_forward)(params, gene_input, smiles_input)
    out = jax.block_until_ready(out)

    assert out.shape == (batch, 1), out.shape
    assert bool(jnp.all((out >= 0.0) & (out <= 1.0)))

    ref = reference_forward(params, gene_input, smiles_input)
    assert bool(jnp.allclose(out, ref, atol=5e-2)), (out, ref)

    print("KERNEL_OK")
</pallas_src>

<mosaic_0001>
module attributes {stable_mosaic.version = 11 : i64} {
  func.func @_dnn_kernel(%arg0: i32, %arg1: memref<8x8xi32, #tpu.memory_space<vmem>>, %arg2: memref<8x8xi32, #tpu.memory_space<vmem>>, %arg3: memref<24x32xbf16, #tpu.memory_space<vmem>>, %arg4: memref<40x32xbf16, #tpu.memory_space<vmem>>, %arg5: memref<512x64xbf16, #tpu.memory_space<vmem>>, %arg6: memref<1x64xf32, #tpu.memory_space<vmem>>, %arg7: memref<64x32xbf16, #tpu.memory_space<vmem>>, %arg8: memref<1x32xf32, #tpu.memory_space<vmem>>, %arg9: memref<1x32xf32, #tpu.memory_space<vmem>>, %arg10: memref<1x1xf32, #tpu.memory_space<vmem>>, %arg11: memref<8x1xf32, #tpu.memory_space<vmem>>) attributes {dimension_semantics = [#tpu.dimension_semantics<parallel>], iteration_bounds = array<i64: 1>, scalar_prefetch = 0 : i64, scratch_operands = 0 : i64, tpu.core_type = #tpu.core_type<tc>, window_params = [{transform_indices = @transform_0, window_bounds = array<i64: 8, 8>}, {transform_indices = @transform_1, window_bounds = array<i64: 8, 8>}, {pipeline_mode = #tpu.pipeline_mode<synchronous>, transform_indices = @transform_2, window_bounds = array<i64: 24, 32>}, {pipeline_mode = #tpu.pipeline_mode<synchronous>, transform_indices = @transform_3, window_bounds = array<i64: 40, 32>}, {pipeline_mode = #tpu.pipeline_mode<synchronous>, transform_indices = @transform_4, window_bounds = array<i64: 512, 64>}, {pipeline_mode = #tpu.pipeline_mode<synchronous>, transform_indices = @transform_5, window_bounds = array<i64: 1, 64>}, {pipeline_mode = #tpu.pipeline_mode<synchronous>, transform_indices = @transform_6, window_bounds = array<i64: 64, 32>}, {pipeline_mode = #tpu.pipeline_mode<synchronous>, transform_indices = @transform_7, window_bounds = array<i64: 1, 32>}, {pipeline_mode = #tpu.pipeline_mode<synchronous>, transform_indices = @transform_8, window_bounds = array<i64: 1, 32>}, {pipeline_mode = #tpu.pipeline_mode<synchronous>, transform_indices = @transform_9, window_bounds = array<i64: 1, 1>}, {transform_indices = @transform_10, window_bounds = array<i64: 8, 1>}]} {
    %c0 = arith.constant 0 : index
    %c0_0 = arith.constant 0 : index
    %0 = vector.load %arg1[%c0, %c0_0] : memref<8x8xi32, #tpu.memory_space<vmem>>, vector<8x8xi32>
    %c0_1 = arith.constant 0 : index
    %c0_2 = arith.constant 0 : index
    %1 = vector.load %arg2[%c0_1, %c0_2] : memref<8x8xi32, #tpu.memory_space<vmem>>, vector<8x8xi32>
    %c0_3 = arith.constant 0 : index
    %c0_4 = arith.constant 0 : index
    %2 = vector.load %arg3[%c0_3, %c0_4] : memref<24x32xbf16, #tpu.memory_space<vmem>>, vector<24x32xbf16>
    %c0_5 = arith.constant 0 : index
    %c0_6 = arith.constant 0 : index
    %3 = vector.load %arg4[%c0_5, %c0_6] : memref<40x32xbf16, #tpu.memory_space<vmem>>, vector<40x32xbf16>
    %4 = tpu.iota {dimensions = array<i32: 1>} : vector<1x24xi32>
    %5 = tpu.iota {dimensions = array<i32: 1>} : vector<1x40xi32>
    %c0_7 = arith.constant 0 : index
    %c0_8 = arith.constant 0 : index
    %6 = vector.load %arg6[%c0_7, %c0_8] : memref<1x64xf32, #tpu.memory_space<vmem>>, vector<1x64xf32>
    %c0_9 = arith.constant 0 : index
    %c0_10 = arith.constant 0 : index
    %7 = vector.load %arg8[%c0_9, %c0_10] : memref<1x32xf32, #tpu.memory_space<vmem>>, vector<1x32xf32>
    %c0_11 = arith.constant 0 : index
    %c0_12 = arith.constant 0 : index
    %8 = vector.load %arg9[%c0_11, %c0_12] : memref<1x32xf32, #tpu.memory_space<vmem>>, vector<1x32xf32>
    %c0_13 = arith.constant 0 : index
    %c0_14 = arith.constant 0 : index
    %9 = vector.load %arg10[%c0_13, %c0_14] : memref<1x1xf32, #tpu.memory_space<vmem>>, vector<1x1xf32>
    %cst = arith.constant 0.000000e+00 : f32
    %10 = vector.broadcast %cst : f32 to vector<8x64xf32>
    %11 = vector.extract_strided_slice %0 {offsets = [0, 0], sizes = [8, 1], strides = [1, 1]} : vector<8x8xi32> to vector<8x1xi32>
    %12 = vector.broadcast %11 : vector<8x1xi32> to vector<8x24xi32>
    %13 = vector.broadcast %4 : vector<1x24xi32> to vector<8x24xi32>
    %14 = arith.cmpi eq, %12, %13 : vector<8x24xi32>
    %15 = arith.extui %14 : vector<8x24xi1> to vector<8x24xi32>
    %16 = arith.sitofp %15 : vector<8x24xi32> to vector<8x24xf32>
    %17 = arith.truncf %16 : vector<8x24xf32> to vector<8x24xbf16>
    %cst_15 = arith.constant dense<0.000000e+00> : vector<8x32xf32>
    %18 = tpu.matmul %17, %2, %cst_15 {dimension_numbers = #tpu.dot_dimension_numbers<[1], [0], [0], [1], [0, 0, 1, 1], [], []>} : vector<8x24xbf16>, vector<24x32xbf16>, vector<8x32xf32> -> vector<8x32xf32>
    %c0_16 = arith.constant 0 : index
    %c0_17 = arith.constant 0 : index
    %19 = vector.load %arg5[%c0_16, %c0_17] : memref<512x64xbf16, #tpu.memory_space<vmem>>, vector<32x64xbf16>
    %20 = arith.truncf %18 : vector<8x32xf32> to vector<8x32xbf16>
    %cst_18 = arith.constant dense<0.000000e+00> : vector<8x64xf32>
    %21 = tpu.matmul %20, %19, %cst_18 {dimension_numbers = #tpu.dot_dimension_numbers<[1], [0], [0], [1], [0, 0, 1, 1], [], []>} : vector<8x32xbf16>, vector<32x64xbf16>, vector<8x64xf32> -> vector<8x64xf32>
    %22 = arith.addf %10, %21 : vector<8x64xf32>
    %23 = vector.extract_strided_slice %0 {offsets = [0, 1], sizes = [8, 1], strides = [1, 1]} : vector<8x8xi32> to vector<8x1xi32>
    %24 = vector.broadcast %23 : vector<8x1xi32> to vector<8x24xi32>
    %25 = vector.broadcast %4 : vector<1x24xi32> to vector<8x24xi32>
    %26 = arith.cmpi eq, %24, %25 : vector<8x24xi32>
    %27 = arith.extui %26 : vector<8x24xi1> to vector<8x24xi32>
    %28 = arith.sitofp %27 : vector<8x24xi32> to vector<8x24xf32>
    %29 = arith.truncf %28 : vector<8x24xf32> to vector<8x24xbf16>
    %cst_19 = arith.constant dense<0.000000e+00> : vector<8x32xf32>
    %30 = tpu.matmul %29, %2, %cst_19 {dimension_numbers = #tpu.dot_dimension_numbers<[1], [0], [0], [1], [0, 0, 1, 1], [], []>} : vector<8x24xbf16>, vector<24x32xbf16>, vector<8x32xf32> -> vector<8x32xf32>
    %c32 = arith.constant 32 : index
    %c0_20 = arith.constant 0 : index
    %31 = vector.load %arg5[%c32, %c0_20] : memref<512x64xbf16, #tpu.memory_space<vmem>>, vector<32x64xbf16>
    %32 = arith.truncf %30 : vector<8x32xf32> to vector<8x32xbf16>
    %cst_21 = arith.constant dense<0.000000e+00> : vector<8x64xf32>
    %33 = tpu.matmul %32, %31, %cst_21 {dimension_numbers = #tpu.dot_dimension_numbers<[1], [0], [0], [1], [0, 0, 1, 1], [], []>} : vector<8x32xbf16>, vector<32x64xbf16>, vector<8x64xf32> -> vector<8x64xf32>
    %34 = arith.addf %22, %33 : vector<8x64xf32>
    %35 = vector.extract_strided_slice %0 {offsets = [0, 2], sizes = [8, 1], strides = [1, 1]} : vector<8x8xi32> to vector<8x1xi32>
    %36 = vector.broadcast %35 : vector<8x1xi32> to vector<8x24xi32>
    %37 = vector.broadcast %4 : vector<1x24xi32> to vector<8x24xi32>
    %38 = arith.cmpi eq, %36, %37 : vector<8x24xi32>
    %39 = arith.extui %38 : vector<8x24xi1> to vector<8x24xi32>
    %40 = arith.sitofp %39 : vector<8x24xi32> to vector<8x24xf32>
    %41 = arith.truncf %40 : vector<8x24xf32> to vector<8x24xbf16>
    %cst_22 = arith.constant dense<0.000000e+00> : vector<8x32xf32>
    %42 = tpu.matmul %41, %2, %cst_22 {dimension_numbers = #tpu.dot_dimension_numbers<[1], [0], [0], [1], [0, 0, 1, 1], [], []>} : vector<8x24xbf16>, vector<24x32xbf16>, vector<8x32xf32> -> vector<8x32xf32>
    %c64 = arith.constant 64 : index
    %c0_23 = arith.constant 0 : index
    %43 = vector.load %arg5[%c64, %c0_23] : memref<512x64xbf16, #tpu.memory_space<vmem>>, vector<32x64xbf16>
    %44 = arith.truncf %42 : vector<8x32xf32> to vector<8x32xbf16>
    %cst_24 = arith.constant dense<0.000000e+00> : vector<8x64xf32>
    %45 = tpu.matmul %44, %43, %cst_24 {dimension_numbers = #tpu.dot_dimension_numbers<[1], [0], [0], [1], [0, 0, 1, 1], [], []>} : vector<8x32xbf16>, vector<32x64xbf16>, vector<8x64xf32> -> vector<8x64xf32>
    %46 = arith.addf %34, %45 : vector<8x64xf32>
    %47 = vector.extract_strided_slice %0 {offsets = [0, 3], sizes = [8, 1], strides = [1, 1]} : vector<8x8xi32> to vector<8x1xi32>
    %48 = vector.broadcast %47 : vector<8x1xi32> to vector<8x24xi32>
    %49 = vector.broadcast %4 : vector<1x24xi32> to vector<8x24xi32>
    %50 = arith.cmpi eq, %48, %49 : vector<8x24xi32>
    %51 = arith.extui %50 : vector<8x24xi1> to vector<8x24xi32>
    %52 = arith.sitofp %51 : vector<8x24xi32> to vector<8x24xf32>
    %53 = arith.truncf %52 : vector<8x24xf32> to vector<8x24xbf16>
    %cst_25 = arith.constant dense<0.000000e+00> : vector<8x32xf32>
    %54 = tpu.matmul %53, %2, %cst_25 {dimension_numbers = #tpu.dot_dimension_numbers<[1], [0], [0], [1], [0, 0, 1, 1], [], []>} : vector<8x24xbf16>, vector<24x32xbf16>, vector<8x32xf32> -> vector<8x32xf32>
    %c96 = arith.constant 96 : index
    %c0_26 = arith.constant 0 : index
    %55 = vector.load %arg5[%c96, %c0_26] : memref<512x64xbf16, #tpu.memory_space<vmem>>, vector<32x64xbf16>
    %56 = arith.truncf %54 : vector<8x32xf32> to vector<8x32xbf16>
    %cst_27 = arith.constant dense<0.000000e+00> : vector<8x64xf32>
    %57 = tpu.matmul %56, %55, %cst_27 {dimension_numbers = #tpu.dot_dimension_numbers<[1], [0], [0], [1], [0, 0, 1, 1], [], []>} : vector<8x32xbf16>, vector<32x64xbf16>, vector<8x64xf32> -> vector<8x64xf32>
    %58 = arith.addf %46, %57 : vector<8x64xf32>
    %59 = vector.extract_strided_slice %0 {offsets = [0, 4], sizes = [8, 1], strides = [1, 1]} : vector<8x8xi32> to vector<8x1xi32>
    %60 = vector.broadcast %59 : vector<8x1xi32> to vector<8x24xi32>
    %61 = vector.broadcast %4 : vector<1x24xi32> to vector<8x24xi32>
    %62 = arith.cmpi eq, %60, %61 : vector<8x24xi32>
    %63 = arith.extui %62 : vector<8x24xi1> to vector<8x24xi32>
    %64 = arith.sitofp %63 : vector<8x24xi32> to vector<8x24xf32>
    %65 = arith.truncf %64 : vector<8x24xf32> to vector<8x24xbf16>
    %cst_28 = arith.constant dense<0.000000e+00> : vector<8x32xf32>
    %66 = tpu.matmul %65, %2, %cst_28 {dimension_numbers = #tpu.dot_dimension_numbers<[1], [0], [0], [1], [0, 0, 1, 1], [], []>} : vector<8x24xbf16>, vector<24x32xbf16>, vector<8x32xf32> -> vector<8x32xf32>
    %c128 = arith.constant 128 : index
    %c0_29 = arith.constant 0 : index
    %67 = vector.load %arg5[%c128, %c0_29] : memref<512x64xbf16, #tpu.memory_space<vmem>>, vector<32x64xbf16>
    %68 = arith.truncf %66 : vector<8x32xf32> to vector<8x32xbf16>
    %cst_30 = arith.constant dense<0.000000e+00> : vector<8x64xf32>
    %69 = tpu.matmul %68, %67, %cst_30 {dimension_numbers = #tpu.dot_dimension_numbers<[1], [0], [0], [1], [0, 0, 1, 1], [], []>} : vector<8x32xbf16>, vector<32x64xbf16>, vector<8x64xf32> -> vector<8x64xf32>
    %70 = arith.addf %58, %69 : vector<8x64xf32>
    %71 = vector.extract_strided_slice %0 {offsets = [0, 5], sizes = [8, 1], strides = [1, 1]} : vector<8x8xi32> to vector<8x1xi32>
    %72 = vector.broadcast %71 : vector<8x1xi32> to vector<8x24xi32>
    %73 = vector.broadcast %4 : vector<1x24xi32> to vector<8x24xi32>
    %74 = arith.cmpi eq, %72, %73 : vector<8x24xi32>
    %75 = arith.extui %74 : vector<8x24xi1> to vector<8x24xi32>
    %76 = arith.sitofp %75 : vector<8x24xi32> to vector<8x24xf32>
    %77 = arith.truncf %76 : vector<8x24xf32> to vector<8x24xbf16>
    %cst_31 = arith.constant dense<0.000000e+00> : vector<8x32xf32>
    %78 = tpu.matmul %77, %2, %cst_31 {dimension_numbers = #tpu.dot_dimension_numbers<[1], [0], [0], [1], [0, 0, 1, 1], [], []>} : vector<8x24xbf16>, vector<24x32xbf16>, vector<8x32xf32> -> vector<8x32xf32>
    %c160 = arith.constant 160 : index
    %c0_32 = arith.constant 0 : index
    %79 = vector.load %arg5[%c160, %c0_32] : memref<512x64xbf16, #tpu.memory_space<vmem>>, vector<32x64xbf16>
    %80 = arith.truncf %78 : vector<8x32xf32> to vector<8x32xbf16>
    %cst_33 = arith.constant dense<0.000000e+00> : vector<8x64xf32>
    %81 = tpu.matmul %80, %79, %cst_33 {dimension_numbers = #tpu.dot_dimension_numbers<[1], [0], [0], [1], [0, 0, 1, 1], [], []>} : vector<8x32xbf16>, vector<32x64xbf16>, vector<8x64xf32> -> vector<8x64xf32>
    %82 = arith.addf %70, %81 : vector<8x64xf32>
    %83 = vector.extract_strided_slice %0 {offsets = [0, 6], sizes = [8, 1], strides = [1, 1]} : vector<8x8xi32> to vector<8x1xi32>
    %84 = vector.broadcast %83 : vector<8x1xi32> to vector<8x24xi32>
    %85 = vector.broadcast %4 : vector<1x24xi32> to vector<8x24xi32>
    %86 = arith.cmpi eq, %84, %85 : vector<8x24xi32>
    %87 = arith.extui %86 : vector<8x24xi1> to vector<8x24xi32>
    %88 = arith.sitofp %87 : vector<8x24xi32> to vector<8x24xf32>
    %89 = arith.truncf %88 : vector<8x24xf32> to vector<8x24xbf16>
    %cst_34 = arith.constant dense<0.000000e+00> : vector<8x32xf32>
    %90 = tpu.matmul %89, %2, %cst_34 {dimension_numbers = #tpu.dot_dimension_numbers<[1], [0], [0], [1], [0, 0, 1, 1], [], []>} : vector<8x24xbf16>, vector<24x32xbf16>, vector<8x32xf32> -> vector<8x32xf32>
    %c192 = arith.constant 192 : index
    %c0_35 = arith.constant 0 : index
    %91 = vector.load %arg5[%c192, %c0_35] : memref<512x64xbf16, #tpu.memory_space<vmem>>, vector<32x64xbf16>
    %92 = arith.truncf %90 : vector<8x32xf32> to vector<8x32xbf16>
    %cst_36 = arith.constant dense<0.000000e+00> : vector<8x64xf32>
    %93 = tpu.matmul %92, %91, %cst_36 {dimension_numbers = #tpu.dot_dimension_numbers<[1], [0], [0], [1], [0, 0, 1, 1], [], []>} : vector<8x32xbf16>, vector<32x64xbf16>, vector<8x64xf32> -> vector<8x64xf32>
    %94 = arith.addf %82, %93 : vector<8x64xf32>
    %95 = vector.extract_strided_slice %0 {offsets = [0, 7], sizes = [8, 1], strides = [1, 1]} : vector<8x8xi32> to vector<8x1xi32>
    %96 = vector.broadcast %95 : vector<8x1xi32> to vector<8x24xi32>
    %97 = vector.broadcast %4 : vector<1x24xi32> to vector<8x24xi32>
    %98 = arith.cmpi eq, %96, %97 : vector<8x24xi32>
    %99 = arith.extui %98 : vector<8x24xi1> to vector<8x24xi32>
    %100 = arith.sitofp %99 : vector<8x24xi32> to vector<8x24xf32>
    %101 = arith.truncf %100 : vector<8x24xf32> to vector<8x24xbf16>
    %cst_37 = arith.constant dense<0.000000e+00> : vector<8x32xf32>
    %102 = tpu.matmul %101, %2, %cst_37 {dimension_numbers = #tpu.dot_dimension_numbers<[1], [0], [0], [1], [0, 0, 1, 1], [], []>} : vector<8x24xbf16>, vector<24x32xbf16>, vector<8x32xf32> -> vector<8x32xf32>
    %c224 = arith.constant 224 : index
    %c0_38 = arith.constant 0 : index
    %103 = vector.load %arg5[%c224, %c0_38] : memref<512x64xbf16, #tpu.memory_space<vmem>>, vector<32x64xbf16>
    %104 = arith.truncf %102 : vector<8x32xf32> to vector<8x32xbf16>
    %cst_39 = arith.constant dense<0.000000e+00> : vector<8x64xf32>
    %105 = tpu.matmul %104, %103, %cst_39 {dimension_numbers = #tpu.dot_dimension_numbers<[1], [0], [0], [1], [0, 0, 1, 1], [], []>} : vector<8x32xbf16>, vector<32x64xbf16>, vector<8x64xf32> -> vector<8x64xf32>
    %106 = arith.addf %94, %105 : vector<8x64xf32>
    %107 = vector.extract_strided_slice %1 {offsets = [0, 0], sizes = [8, 1], strides = [1, 1]} : vector<8x8xi32> to vector<8x1xi32>
    %108 = vector.broadcast %107 : vector<8x1xi32> to vector<8x40xi32>
    %109 = vector.broadcast %5 : vector<1x40xi32> to vector<8x40xi32>
    %110 = arith.cmpi eq, %108, %109 : vector<8x40xi32>
    %111 = arith.extui %110 : vector<8x40xi1> to vector<8x40xi32>
    %112 = arith.sitofp %111 : vector<8x40xi32> to vector<8x40xf32>
    %113 = arith.truncf %112 : vector<8x40xf32> to vector<8x40xbf16>
    %cst_40 = arith.constant dense<0.000000e+00> : vector<8x32xf32>
    %114 = tpu.matmul %113, %3, %cst_40 {dimension_numbers = #tpu.dot_dimension_numbers<[1], [0], [0], [1], [0, 0, 1, 1], [], []>} : vector<8x40xbf16>, vector<40x32xbf16>, vector<8x32xf32> -> vector<8x32xf32>
    %c256 = arith.constant 256 : index
    %c0_41 = arith.constant 0 : index
    %115 = vector.load %arg5[%c256, %c0_41] : memref<512x64xbf16, #tpu.memory_space<vmem>>, vector<32x64xbf16>
    %116 = arith.truncf %114 : vector<8x32xf32> to vector<8x32xbf16>
    %cst_42 = arith.constant dense<0.000000e+00> : vector<8x64xf32>
    %117 = tpu.matmul %116, %115, %cst_42 {dimension_numbers = #tpu.dot_dimension_numbers<[1], [0], [0], [1], [0, 0, 1, 1], [], []>} : vector<8x32xbf16>, vector<32x64xbf16>, vector<8x64xf32> -> vector<8x64xf32>
    %118 = arith.addf %106, %117 : vector<8x64xf32>
    %119 = vector.extract_strided_slice %1 {offsets = [0, 1], sizes = [8, 1], strides = [1, 1]} : vector<8x8xi32> to vector<8x1xi32>
    %120 = vector.broadcast %119 : vector<8x1xi32> to vector<8x40xi32>
    %121 = vector.broadcast %5 : vector<1x40xi32> to vector<8x40xi32>
    %122 = arith.cmpi eq, %120, %121 : vector<8x40xi32>
    %123 = arith.extui %122 : vector<8x40xi1> to vector<8x40xi32>
    %124 = arith.sitofp %123 : vector<8x40xi32> to vector<8x40xf32>
    %125 = arith.truncf %124 : vector<8x40xf32> to vector<8x40xbf16>
    %cst_43 = arith.constant dense<0.000000e+00> : vector<8x32xf32>
    %126 = tpu.matmul %125, %3, %cst_43 {dimension_numbers = #tpu.dot_dimension_numbers<[1], [0], [0], [1], [0, 0, 1, 1], [], []>} : vector<8x40xbf16>, vector<40x32xbf16>, vector<8x32xf32> -> vector<8x32xf32>
    %c288 = arith.constant 288 : index
    %c0_44 = arith.constant 0 : index
    %127 = vector.load %arg5[%c288, %c0_44] : memref<512x64xbf16, #tpu.memory_space<vmem>>, vector<32x64xbf16>
    %128 = arith.truncf %126 : vector<8x32xf32> to vector<8x32xbf16>
    %cst_45 = arith.constant dense<0.000000e+00> : vector<8x64xf32>
    %129 = tpu.matmul %128, %127, %cst_45 {dimension_numbers = #tpu.dot_dimension_numbers<[1], [0], [0], [1], [0, 0, 1, 1], [], []>} : vector<8x32xbf16>, vector<32x64xbf16>, vector<8x64xf32> -> vector<8x64xf32>
    %130 = arith.addf %118, %129 : vector<8x64xf32>
    %131 = vector.extract_strided_slice %1 {offsets = [0, 2], sizes = [8, 1], strides = [1, 1]} : vector<8x8xi32> to vector<8x1xi32>
    %132 = vector.broadcast %131 : vector<8x1xi32> to vector<8x40xi32>
    %133 = vector.broadcast %5 : vector<1x40xi32> to vector<8x40xi32>
    %134 = arith.cmpi eq, %132, %133 : vector<8x40xi32>
    %135 = arith.extui %134 : vector<8x40xi1> to vector<8x40xi32>
    %136 = arith.sitofp %135 : vector<8x40xi32> to vector<8x40xf32>
    %137 = arith.truncf %136 : vector<8x40xf32> to vector<8x40xbf16>
    %cst_46 = arith.constant dense<0.000000e+00> : vector<8x32xf32>
    %138 = tpu.matmul %137, %3, %cst_46 {dimension_numbers = #tpu.dot_dimension_numbers<[1], [0], [0], [1], [0, 0, 1, 1], [], []>} : vector<8x40xbf16>, vector<40x32xbf16>, vector<8x32xf32> -> vector<8x32xf32>
    %c320 = arith.constant 320 : index
    %c0_47 = arith.constant 0 : index
    %139 = vector.load %arg5[%c320, %c0_47] : memref<512x64xbf16, #tpu.memory_space<vmem>>, vector<32x64xbf16>
    %140 = arith.truncf %138 : vector<8x32xf32> to vector<8x32xbf16>
    %cst_48 = arith.constant dense<0.000000e+00> : vector<8x64xf32>
    %141 = tpu.matmul %140, %139, %cst_48 {dimension_numbers = #tpu.dot_dimension_numbers<[1], [0], [0], [1], [0, 0, 1, 1], [], []>} : vector<8x32xbf16>, vector<32x64xbf16>, vector<8x64xf32> -> vector<8x64xf32>
    %142 = arith.addf %130, %141 : vector<8x64xf32>
    %143 = vector.extract_strided_slice %1 {offsets = [0, 3], sizes = [8, 1], strides = [1, 1]} : vector<8x8xi32> to vector<8x1xi32>
    %144 = vector.broadcast %143 : vector<8x1xi32> to vector<8x40xi32>
    %145 = vector.broadcast %5 : vector<1x40xi32> to vector<8x40xi32>
    %146 = arith.cmpi eq, %144, %145 : vector<8x40xi32>
    %147 = arith.extui %146 : vector<8x40xi1> to vector<8x40xi32>
    %148 = arith.sitofp %147 : vector<8x40xi32> to vector<8x40xf32>
    %149 = arith.truncf %148 : vector<8x40xf32> to vector<8x40xbf16>
    %cst_49 = arith.constant dense<0.000000e+00> : vector<8x32xf32>
    %150 = tpu.matmul %149, %3, %cst_49 {dimension_numbers = #tpu.dot_dimension_numbers<[1], [0], [0], [1], [0, 0, 1, 1], [], []>} : vector<8x40xbf16>, vector<40x32xbf16>, vector<8x32xf32> -> vector<8x32xf32>
    %c352 = arith.constant 352 : index
    %c0_50 = arith.constant 0 : index
    %151 = vector.load %arg5[%c352, %c0_50] : memref<512x64xbf16, #tpu.memory_space<vmem>>, vector<32x64xbf16>
    %152 = arith.truncf %150 : vector<8x32xf32> to vector<8x32xbf16>
    %cst_51 = arith.constant dense<0.000000e+00> : vector<8x64xf32>
    %153 = tpu.matmul %152, %151, %cst_51 {dimension_numbers = #tpu.dot_dimension_numbers<[1], [0], [0], [1], [0, 0, 1, 1], [], []>} : vector<8x32xbf16>, vector<32x64xbf16>, vector<8x64xf32> -> vector<8x64xf32>
    %154 = arith.addf %142, %153 : vector<8x64xf32>
    %155 = vector.extract_strided_slice %1 {offsets = [0, 4], sizes = [8, 1], strides = [1, 1]} : vector<8x8xi32> to vector<8x1xi32>
    %156 = vector.broadcast %155 : vector<8x1xi32> to vector<8x40xi32>
    %157 = vector.broadcast %5 : vector<1x40xi32> to vector<8x40xi32>
    %158 = arith.cmpi eq, %156, %157 : vector<8x40xi32>
    %159 = arith.extui %158 : vector<8x40xi1> to vector<8x40xi32>
    %160 = arith.sitofp %159 : vector<8x40xi32> to vector<8x40xf32>
    %161 = arith.truncf %160 : vector<8x40xf32> to vector<8x40xbf16>
    %cst_52 = arith.constant dense<0.000000e+00> : vector<8x32xf32>
    %162 = tpu.matmul %161, %3, %cst_52 {dimension_numbers = #tpu.dot_dimension_numbers<[1], [0], [0], [1], [0, 0, 1, 1], [], []>} : vector<8x40xbf16>, vector<40x32xbf16>, vector<8x32xf32> -> vector<8x32xf32>
    %c384 = arith.constant 384 : index
    %c0_53 = arith.constant 0 : index
    %163 = vector.load %arg5[%c384, %c0_53] : memref<512x64xbf16, #tpu.memory_space<vmem>>, vector<32x64xbf16>
    %164 = arith.truncf %162 : vector<8x32xf32> to vector<8x32xbf16>
    %cst_54 = arith.constant dense<0.000000e+00> : vector<8x64xf32>
    %165 = tpu.matmul %164, %163, %cst_54 {dimension_numbers = #tpu.dot_dimension_numbers<[1], [0], [0], [1], [0, 0, 1, 1], [], []>} : vector<8x32xbf16>, vector<32x64xbf16>, vector<8x64xf32> -> vector<8x64xf32>
    %166 = arith.addf %154, %165 : vector<8x64xf32>
    %167 = vector.extract_strided_slice %1 {offsets = [0, 5], sizes = [8, 1], strides = [1, 1]} : vector<8x8xi32> to vector<8x1xi32>
    %168 = vector.broadcast %167 : vector<8x1xi32> to vector<8x40xi32>
    %169 = vector.broadcast %5 : vector<1x40xi32> to vector<8x40xi32>
    %170 = arith.cmpi eq, %168, %169 : vector<8x40xi32>
    %171 = arith.extui %170 : vector<8x40xi1> to vector<8x40xi32>
    %172 = arith.sitofp %171 : vector<8x40xi32> to vector<8x40xf32>
    %173 = arith.truncf %172 : vector<8x40xf32> to vector<8x40xbf16>
    %cst_55 = arith.constant dense<0.000000e+00> : vector<8x32xf32>
    %174 = tpu.matmul %173, %3, %cst_55 {dimension_numbers = #tpu.dot_dimension_numbers<[1], [0], [0], [1], [0, 0, 1, 1], [], []>} : vector<8x40xbf16>, vector<40x32xbf16>, vector<8x32xf32> -> vector<8x32xf32>
    %c416 = arith.constant 416 : index
    %c0_56 = arith.constant 0 : index
    %175 = vector.load %arg5[%c416, %c0_56] : memref<512x64xbf16, #tpu.memory_space<vmem>>, vector<32x64xbf16>
    %176 = arith.truncf %174 : vector<8x32xf32> to vector<8x32xbf16>
    %cst_57 = arith.constant dense<0.000000e+00> : vector<8x64xf32>
    %177 = tpu.matmul %176, %175, %cst_57 {dimension_numbers = #tpu.dot_dimension_numbers<[1], [0], [0], [1], [0, 0, 1, 1], [], []>} : vector<8x32xbf16>, vector<32x64xbf16>, vector<8x64xf32> -> vector<8x64xf32>
    %178 = arith.addf %166, %177 : vector<8x64xf32>
    %179 = vector.extract_strided_slice %1 {offsets = [0, 6], sizes = [8, 1], strides = [1, 1]} : vector<8x8xi32> to vector<8x1xi32>
    %180 = vector.broadcast %179 : vector<8x1xi32> to vector<8x40xi32>
    %181 = vector.broadcast %5 : vector<1x40xi32> to vector<8x40xi32>
    %182 = arith.cmpi eq, %180, %181 : vector<8x40xi32>
    %183 = arith.extui %182 : vector<8x40xi1> to vector<8x40xi32>
    %184 = arith.sitofp %183 : vector<8x40xi32> to vector<8x40xf32>
    %185 = arith.truncf %184 : vector<8x40xf32> to vector<8x40xbf16>
    %cst_58 = arith.constant dense<0.000000e+00> : vector<8x32xf32>
    %186 = tpu.matmul %185, %3, %cst_58 {dimension_numbers = #tpu.dot_dimension_numbers<[1], [0], [0], [1], [0, 0, 1, 1], [], []>} : vector<8x40xbf16>, vector<40x32xbf16>, vector<8x32xf32> -> vector<8x32xf32>
    %c448 = arith.constant 448 : index
    %c0_59 = arith.constant 0 : index
    %187 = vector.load %arg5[%c448, %c0_59] : memref<512x64xbf16, #tpu.memory_space<vmem>>, vector<32x64xbf16>
    %188 = arith.truncf %186 : vector<8x32xf32> to vector<8x32xbf16>
    %cst_60 = arith.constant dense<0.000000e+00> : vector<8x64xf32>
    %189 = tpu.matmul %188, %187, %cst_60 {dimension_numbers = #tpu.dot_dimension_numbers<[1], [0], [0], [1], [0, 0, 1, 1], [], []>} : vector<8x32xbf16>, vector<32x64xbf16>, vector<8x64xf32> -> vector<8x64xf32>
    %190 = arith.addf %178, %189 : vector<8x64xf32>
    %191 = vector.extract_strided_slice %1 {offsets = [0, 7], sizes = [8, 1], strides = [1, 1]} : vector<8x8xi32> to vector<8x1xi32>
    %192 = vector.broadcast %191 : vector<8x1xi32> to vector<8x40xi32>
    %193 = vector.broadcast %5 : vector<1x40xi32> to vector<8x40xi32>
    %194 = arith.cmpi eq, %192, %193 : vector<8x40xi32>
    %195 = arith.extui %194 : vector<8x40xi1> to vector<8x40xi32>
    %196 = arith.sitofp %195 : vector<8x40xi32> to vector<8x40xf32>
    %197 = arith.truncf %196 : vector<8x40xf32> to vector<8x40xbf16>
    %cst_61 = arith.constant dense<0.000000e+00> : vector<8x32xf32>
    %198 = tpu.matmul %197, %3, %cst_61 {dimension_numbers = #tpu.dot_dimension_numbers<[1], [0], [0], [1], [0, 0, 1, 1], [], []>} : vector<8x40xbf16>, vector<40x32xbf16>, vector<8x32xf32> -> vector<8x32xf32>
    %c480 = arith.constant 480 : index
    %c0_62 = arith.constant 0 : index
    %199 = vector.load %arg5[%c480, %c0_62] : memref<512x64xbf16, #tpu.memory_space<vmem>>, vector<32x64xbf16>
    %200 = arith.truncf %198 : vector<8x32xf32> to vector<8x32xbf16>
    %cst_63 = arith.constant dense<0.000000e+00> : vector<8x64xf32>
    %201 = tpu.matmul %200, %199, %cst_63 {dimension_numbers = #tpu.dot_dimension_numbers<[1], [0], [0], [1], [0, 0, 1, 1], [], []>} : vector<8x32xbf16>, vector<32x64xbf16>, vector<8x64xf32> -> vector<8x64xf32>
    %202 = arith.addf %190, %201 : vector<8x64xf32>
    %203 = vector.broadcast %6 : vector<1x64xf32> to vector<8x64xf32>
    %204 = arith.addf %202, %203 : vector<8x64xf32>
    %cst_64 = arith.constant 0.000000e+00 : f32
    %205 = vector.broadcast %cst_64 : f32 to vector<8x64xf32>
    %206 = arith.maximumf %204, %205 : vector<8x64xf32>
    %207 = arith.truncf %206 : vector<8x64xf32> to vector<8x64xbf16>
    %c0_65 = arith.constant 0 : index
    %c0_66 = arith.constant 0 : index
    %208 = vector.load %arg7[%c0_65, %c0_66] : memref<64x32xbf16, #tpu.memory_space<vmem>>, vector<64x32xbf16>
    %cst_67 = arith.constant dense<0.000000e+00> : vector<8x32xf32>
    %209 = tpu.matmul %207, %208, %cst_67 {dimension_numbers = #tpu.dot_dimension_numbers<[1], [0], [0], [1], [0, 0, 1, 1], [], []>} : vector<8x64xbf16>, vector<64x32xbf16>, vector<8x32xf32> -> vector<8x32xf32>
    %210 = vector.broadcast %7 : vector<1x32xf32> to vector<8x32xf32>
    %211 = arith.addf %209, %210 : vector<8x32xf32>
    %cst_68 = arith.constant 0.000000e+00 : f32
    %212 = vector.broadcast %cst_68 : f32 to vector<8x32xf32>
    %213 = arith.maximumf %211, %212 : vector<8x32xf32>
    %214 = vector.broadcast %8 : vector<1x32xf32> to vector<8x32xf32>
    %215 = arith.mulf %213, %214 : vector<8x32xf32>
    %cst_69 = arith.constant dense<0.000000e+00> : vector<8xf32>
    %216 = vector.multi_reduction <add>, %215, %cst_69 [1] : vector<8x32xf32> to vector<8xf32>
    %217 = vector.shape_cast %216 : vector<8xf32> to vector<8x1xf32>
    %218 = vector.broadcast %9 : vector<1x1xf32> to vector<8x1xf32>
    %219 = arith.addf %217, %218 : vector<8x1xf32>
    %220 = arith.negf %219 : vector<8x1xf32>
    %221 = math.exp %220 : vector<8x1xf32>
    %cst_70 = arith.constant 1.000000e+00 : f32
    %222 = vector.broadcast %cst_70 : f32 to vector<8x1xf32>
    %223 = arith.addf %222, %221 : vector<8x1xf32>
    %224 = arith.divf %222, %223 : vector<8x1xf32>
    %c0_71 = arith.constant 0 : index
    %c0_72 = arith.constant 0 : index
    %225 = vector.load %arg11[%c0_71, %c0_72] : memref<8x1xf32, #tpu.memory_space<vmem>>, vector<8x1xf32>
    tpu.vector_store %arg11[%c0_71, %c0_72], %224 {strides = array<i32>} : memref<8x1xf32, #tpu.memory_space<vmem>>, vector<8x1xf32>,
    return
  }
  func.func @transform_0(%arg0: i32) -> (i32, i32) {
    %c0_i32 = arith.constant 0 : i32
    %c0_i32_0 = arith.constant 0 : i32
    return %arg0, %c0_i32 : i32, i32
  }
  func.func @transform_1(%arg0: i32) -> (i32, i32) {
    %c0_i32 = arith.constant 0 : i32
    %c0_i32_0 = arith.constant 0 : i32
    return %arg0, %c0_i32 : i32, i32
  }
  func.func @transform_2(%arg0: i32) -> (i32, i32) {
    %c0_i32 = arith.constant 0 : i32
    %c0_i32_0 = arith.constant 0 : i32
    %c0_i32_1 = arith.constant 0 : i32
    return %c0_i32, %c0_i32_0 : i32, i32
  }
  func.func @transform_3(%arg0: i32) -> (i32, i32) {
    %c0_i32 = arith.constant 0 : i32
    %c0_i32_0 = arith.constant 0 : i32
    %c0_i32_1 = arith.constant 0 : i32
    return %c0_i32, %c0_i32_0 : i32, i32
  }
  func.func @transform_4(%arg0: i32) -> (i32, i32) {
    %c0_i32 = arith.constant 0 : i32
    %c0_i32_0 = arith.constant 0 : i32
    %c0_i32_1 = arith.constant 0 : i32
    return %c0_i32, %c0_i32_0 : i32, i32
  }
  func.func @transform_5(%arg0: i32) -> (i32, i32) {
    %c0_i32 = arith.constant 0 : i32
    %c0_i32_0 = arith.constant 0 : i32
    %c0_i32_1 = arith.constant 0 : i32
    return %c0_i32, %c0_i32_0 : i32, i32
  }
  func.func @transform_6(%arg0: i32) -> (i32, i32) {
    %c0_i32 = arith.constant 0 : i32
    %c0_i32_0 = arith.constant 0 : i32
    %c0_i32_1 = arith.constant 0 : i32
    return %c0_i32, %c0_i32_0 : i32, i32
  }
  func.func @transform_7(%arg0: i32) -> (i32, i32) {
    %c0_i32 = arith.constant 0 : i32
    %c0_i32_0 = arith.constant 0 : i32
    %c0_i32_1 = arith.constant 0 : i32
    return %c0_i32, %c0_i32_0 : i32, i32
  }
  func.func @transform_8(%arg0: i32) -> (i32, i32) {
    %c0_i32 = arith.constant 0 : i32
    %c0_i32_0 = arith.constant 0 : i32
    %c0_i32_1 = arith.constant 0 : i32
    return %c0_i32, %c0_i32_0 : i32, i32
  }
  func.func @transform_9(%arg0: i32) -> (i32, i32) {
    %c0_i32 = arith.constant 0 : i32
    %c0_i32_0 = arith.constant 0 : i32
    %c0_i32_1 = arith.constant 0 : i32
    return %c0_i32, %c0_i32_0 : i32, i32
  }
  func.func @transform_10(%arg0: i32) -> (i32, i32) {
    %c0_i32 = arith.constant 0 : i32
    %c0_i32_0 = arith.constant 0 : i32
    return %arg0, %c0_i32 : i32, i32
  }
}

</mosaic_0001>

<llo_original>
// kernel: dnn_forward.1
$region0: #{dnn_forward.1}
  #allocation0 [shape = 'u32[]', space=smem, size = 0x4, offset = 0x4, fixed_abs, tag = 'smem constant byte address 0x4 - core index']
  #allocation1 [shape = 'u32[144,128]{1,0:T(1,128)}', space=vmem, size = 0x12000, scoped, tag = 'internal scratch']
  #allocation2 [shape = 'f32[1,1]{1,0:T(1,128)S(1)}', space=vmem, size = 0x200, scoped, tag = 'scoped memory for dnn_forward.1']
  %s0 = inlined_call_operand.vmem [shape: s32[8,8], index: 0, kind: input, shape index: {}]
  %s1 = inlined_call_operand.vmem [shape: s32[8,8], index: 1, kind: input, shape index: {}]
  %s2 = inlined_call_operand.vmem [shape: bf16[24,32], index: 2, kind: input, shape index: {}]
  %s3 = inlined_call_operand.vmem [shape: bf16[40,32], index: 3, kind: input, shape index: {}]
  %s4 = inlined_call_operand.vmem [shape: bf16[512,64], index: 4, kind: input, shape index: {}]
  %s5 = inlined_call_operand.vmem [shape: f32[1,64], index: 5, kind: input, shape index: {}]
  %s6 = inlined_call_operand.vmem [shape: bf16[64,32], index: 6, kind: input, shape index: {}]
  %s7 = inlined_call_operand.vmem [shape: f32[1,32], index: 7, kind: input, shape index: {}]
  %s8 = inlined_call_operand.vmem [shape: f32[1,32], index: 8, kind: input, shape index: {}]
  %s9 = inlined_call_operand.<no memory space> [shape: f32[1,1], index: 9, kind: input, shape index: {}]
  %s10 = inlined_call_operand.vmem [shape: f32[8,1], index: 10, kind: output, shape index: {}]
  %s11 = sld [smem:[#allocation0]]
  $region50: #{dnn_forward.1} parent=0
    _
  %s13 = ssub.s32 1, %s11
  %s14 = scalar_select 0, %s13, %s11
  %v15 = vstv %s9
  %16 = vst [vmem:[#allocation2] sm:$0x1] %v15
  // Predicated region
  $region2: #{dnn_forward.1} parent=0 // pred_check
    _
  $region3: #{dnn_forward.1} parent=0 // pred_check_branch
    %18 = sbr.rel (0) target = $region5
  $region4: #{dnn_forward.1} parent=0 // pred_region
    _
  $region5: #{dnn_forward.1} parent=0 // pred_fallthru
    _
  // Predicated region
  $region6: #{dnn_forward.1} parent=0 // pred_check
    _
  $region7: #{dnn_forward.1} parent=0 // pred_check_branch
    %20 = sbr.rel (0) target = $region9
  $region8: #{dnn_forward.1} parent=0 // pred_region
    _
  $region9: #{dnn_forward.1} parent=0 // pred_fallthru
    _
  // Predicated region
  $region10: #{dnn_forward.1} parent=0 // pred_check
    _
  $region11: #{dnn_forward.1} parent=0 // pred_check_branch
    %22 = sbr.rel (0) target = $region13
  $region12: #{dnn_forward.1} parent=0 // pred_region
    _
  $region13: #{dnn_forward.1} parent=0 // pred_fallthru
    _
  // Predicated region
  $region14: #{dnn_forward.1} parent=0 // pred_check
    _
  $region15: #{dnn_forward.1} parent=0 // pred_check_branch
    %24 = sbr.rel (0) target = $region17
  $region16: #{dnn_forward.1} parent=0 // pred_region
    _
  $region17: #{dnn_forward.1} parent=0 // pred_fallthru
    _
  // Predicated region
  $region18: #{dnn_forward.1} parent=0 // pred_check
    _
  $region19: #{dnn_forward.1} parent=0 // pred_check_branch
    %26 = sbr.rel (0) target = $region21
  $region20: #{dnn_forward.1} parent=0 // pred_region
    _
  $region21: #{dnn_forward.1} parent=0 // pred_fallthru
    _
  // Predicated region
  $region22: #{dnn_forward.1} parent=0 // pred_check
    _
  $region23: #{dnn_forward.1} parent=0 // pred_check_branch
    %28 = sbr.rel (0) target = $region25
  $region24: #{dnn_forward.1} parent=0 // pred_region
    _
  $region25: #{dnn_forward.1} parent=0 // pred_fallthru
    _
  // Predicated region
  $region26: #{dnn_forward.1} parent=0 // pred_check
    _
  $region27: #{dnn_forward.1} parent=0 // pred_check_branch
    %30 = sbr.rel (0) target = $region29
  $region28: #{dnn_forward.1} parent=0 // pred_region
    _
  $region29: #{dnn_forward.1} parent=0 // pred_fallthru
    _
  // Predicated region
  $region30: #{dnn_forward.1} parent=0 // pred_check
    _
  $region31: #{dnn_forward.1} parent=0 // pred_check_branch
    %32 = sbr.rel (0) target = $region33
  $region32: #{dnn_forward.1} parent=0 // pred_region
    _
  $region33: #{dnn_forward.1} parent=0 // pred_fallthru
    _
  // Predicated region
  $region34: #{dnn_forward.1} parent=0 // pred_check
    _
  $region35: #{dnn_forward.1} parent=0 // pred_check_branch
    %34 = sbr.rel (0) target = $region37
  $region36: #{dnn_forward.1} parent=0 // pred_region
    _
  $region37: #{dnn_forward.1} parent=0 // pred_fallthru
    _
  // Predicated region
  $region38: #{dnn_forward.1} parent=0 // pred_check
    _
  $region39: #{dnn_forward.1} parent=0 // pred_check_branch
    %36 = sbr.rel (0) target = $region41
  $region40: #{dnn_forward.1} parent=0 // pred_region
    _
  $region41: #{dnn_forward.1} parent=0 // pred_fallthru
    _
  %v38 = vld [vmem:[%s0] sm:$0xff]
  %v39 = vld [vmem:[%s1] sm:$0xff]
  %v40 = vld [vmem:[%s2] sm:$0xf]
  %v41 = vld [vmem:[%s2 + $0x4] sm:$0xf]
  %v42 = vld [vmem:[%s2 + $0x8] sm:$0xf]
  %v43 = vld [vmem:[%s3] sm:$0xf]
  %v44 = vld [vmem:[%s3 + $0x4] sm:$0xf]
  %v45 = vld [vmem:[%s3 + $0x8] sm:$0xf]
  %v46 = vld [vmem:[%s3 + $0xc] sm:$0xf]
  %v47 = vld [vmem:[%s3 + $0x10] sm:$0xf]
  %v48 = vlaneseq
  %v49 = vand.u32 %v48, 127
  %v50 = vld [vmem:[%s5] sm:$0x1]
  %v51 = vld [vmem:[%s7] sm:$0x1]
  %v52 = vld [vmem:[%s8] sm:$0x1]
  %v53 = vld [vmem:[#allocation2] sm:$0x1]
  %54 = vset.pattern.permute.xlu0 0
  %55 = vperm.xlu0 %54, %v38
  %v56 = vpop.permute.xlu0 %55
  %vm57 = vcmp.eq.s32.totalorder %v56, %v49
  %v58 = vsel %vm57, 1, 0
  %v59 = vcvt.s32.f32 %v58
  %v60 = vpack.c.bf16 %v59, %v59
  %v64 = vunpack.c.l.b16 %v40
  %v65 = vunpack.c.l.b16 %v41
  %v66 = vunpack.c.l.b16 %v42
  %v67 = vpack.c.b16 %v65, %v64
  %v68 = vpack.c.b16 %v66, %v66
  %vm70 = vcmask 195584
  %v72 = vsel %vm70, %v60, 0
  %vm74 = vcmask 1043456
  %v76 = vsel %vm74, %v68, 0
  %78 = vmatprep.subr.bf16.mxu0 0
  %79 = vmatpush1.bf16.msra.mxu0 %v67
  %80 = vmatprep.subr.bf16.mxu0 0
  %81 = vmatpush1.bf16.msra.mxu0 %v76
  %82 = vmatprep.subr.bf16.mxu0 0
  %83 = vmatpush1.bf16.msra.mxu0 0
  %84 = vmatprep.subr.bf16.mxu0 0
  %85 = vmatpush1.bf16.msra.mxu0 0
  %86 = vmatprep.subr.bf16.mxu0 0
  %87 = vmatpush1.bf16.msra.mxu0 0
  %88 = vmatprep.subr.bf16.mxu0 0
  %89 = vmatpush1.bf16.msra.mxu0 0
  %90 = vmatprep.subr.bf16.mxu0 0
  %91 = vmatpush1.bf16.msra.mxu0 0
  %92 = vmatprep.subr.bf16.mxu0 0
  %93 = vmatpush1.bf16.msra.mxu0 0
  %94 = vmatprep.subr.bf16.mxu0 0
  %95 = vmatpush1.bf16.msra.mxu0 0
  %96 = vmatprep.subr.bf16.mxu0 0
  %97 = vmatpush1.bf16.msra.mxu0 0
  %98 = vmatprep.subr.bf16.mxu0 0
  %99 = vmatpush1.bf16.msra.mxu0 0
  %100 = vmatprep.subr.bf16.mxu0 0
  %101 = vmatpush1.bf16.msra.mxu0 0
  %102 = vmatprep.subr.bf16.mxu0 0
  %103 = vmatpush1.bf16.msra.mxu0 0
  %104 = vmatprep.subr.bf16.mxu0 0
  %105 = vmatpush1.bf16.msra.mxu0 0
  %106 = vmatprep.subr.bf16.mxu0 0
  %107 = vmatpush1.bf16.msra.mxu0 0
  %108 = vmatprep.subr.bf16.mxu0 0
  %109 = vmatpush1.bf16.msra.mxu0 0
  %110 = vmatprep.mubr.bf16.mxu0 0
  %111 = vmatmul.mubr.bf16.gmra.mrb[0].mxu0 %v72
  %v112 = vpop.f32.mrb[0].mxu0
  %v113 = vadd.f32 0.0, %v112
  %v114 = vpop.f32.mrb[0].mxu0
  %v115 = vpop.f32.mrb[0].mxu0
  %v116 = vpop.f32.mrb[0].mxu0
  %117 = vdwg.mxu0
  %v118 = vld [vmem:[%s4] sm:$0xf]
  %v119 = vld [vmem:[%s4 + $0x4] sm:$0xf]
  %v120 = vld [vmem:[%s4 + $0x8] sm:$0xf]
  %v121 = vld [vmem:[%s4 + $0xc] sm:$0xf]
  %v122 = vpack.c.bf16 %v113, %v113
  %123 = vset.pattern.permute.xlu0 1
  %124 = vperm.xlu0 %123, %v38
  %v125 = vpop.permute.xlu0 %124
  %vm126 = vcmp.eq.s32.totalorder %v125, %v49
  %v127 = vsel %vm126, 1, 0
  %v128 = vcvt.s32.f32 %v127
  %v129 = vpack.c.bf16 %v128, %v128
  %v131 = vsel %vm70, %v129, 0
  %133 = vmatprep.subr.bf16.mxu0 0
  %134 = vmatpush1.bf16.msra.mxu0 %v67
  %135 = vmatprep.subr.bf16.mxu0 0
  %136 = vmatpush1.bf16.msra.mxu0 %v76
  %137 = vmatprep.subr.bf16.mxu0 0
  %138 = vmatpush1.bf16.msra.mxu0 0
  %139 = vmatprep.subr.bf16.mxu0 0
  %140 = vmatpush1.bf16.msra.mxu0 0
  %141 = vmatprep.subr.bf16.mxu0 0
  %142 = vmatpush1.bf16.msra.mxu0 0
  %143 = vmatprep.subr.bf16.mxu0 0
  %144 = vmatpush1.bf16.msra.mxu0 0
  %145 = vmatprep.subr.bf16.mxu0 0
  %146 = vmatpush1.bf16.msra.mxu0 0
  %147 = vmatprep.subr.bf16.mxu0 0
  %148 = vmatpush1.bf16.msra.mxu0 0
  %149 = vmatprep.subr.bf16.mxu0 0
  %150 = vmatpush1.bf16.msra.mxu0 0
  %151 = vmatprep.subr.bf16.mxu0 0
  %152 = vmatpush1.bf16.msra.mxu0 0
  %153 = vmatprep.subr.bf16.mxu0 0
  %154 = vmatpush1.bf16.msra.mxu0 0
  %155 = vmatprep.subr.bf16.mxu0 0
  %156 = vmatpush1.bf16.msra.mxu0 0
  %157 = vmatprep.subr.bf16.mxu0 0
  %158 = vmatpush1.bf16.msra.mxu0 0
  %159 = vmatprep.subr.bf16.mxu0 0
  %160 = vmatpush1.bf16.msra.mxu0 0
  %161 = vmatprep.subr.bf16.mxu0 0
  %162 = vmatpush1.bf16.msra.mxu0 0
  %163 = vmatprep.subr.bf16.mxu0 0
  %164 = vmatpush1.bf16.msra.mxu0 0
  %165 = vmatprep.mubr.bf16.mxu0 0
  %166 = vmatmul.mubr.bf16.gmra.mrb[0].mxu0 %v131
  %v167 = vpop.f32.mrb[0].mxu0
  %v168 = vadd.f32 0.0, %v167
  %v169 = vpop.f32.mrb[0].mxu0
  %v170 = vpop.f32.mrb[0].mxu0
  %v171 = vpop.f32.mrb[0].mxu0
  %172 = vdwg.mxu0
  %v173 = vld [vmem:[%s4 + $0x10] sm:$0xf]
  %v174 = vld [vmem:[%s4 + $0x14] sm:$0xf]
  %v175 = vld [vmem:[%s4 + $0x18] sm:$0xf]
  %v176 = vld [vmem:[%s4 + $0x1c] sm:$0xf]
  %v177 = vpack.c.bf16 %v168, %v168
  %v182 = vunpack.c.l.b16 %v173
  %v183 = vunpack.c.l.b16 %v174
  %v184 = vunpack.c.l.b16 %v175
  %v185 = vunpack.c.l.b16 %v176
  %v186 = vpack.c.b16 %v183, %v182
  %v187 = vpack.c.b16 %v185, %v184
  %vm190 = vcmask 261120
  %v192 = vsel %vm190, %v177, 0
  %194 = vmatprep.subr.bf16.mxu0 0
  %195 = vmatpush1.bf16.msra.mxu0 %v186
  %196 = vmatprep.subr.bf16.mxu0 0
  %197 = vmatpush1.bf16.msra.mxu0 %v187
  %198 = vmatprep.subr.bf16.mxu0 0
  %199 = vmatpush1.bf16.msra.mxu0 0
  %200 = vmatprep.subr.bf16.mxu0 0
  %201 = vmatpush1.bf16.msra.mxu0 0
  %202 = vmatprep.subr.bf16.mxu0 0
  %203 = vmatpush1.bf16.msra.mxu0 0
  %204 = vmatprep.subr.bf16.mxu0 0
  %205 = vmatpush1.bf16.msra.mxu0 0
  %206 = vmatprep.subr.bf16.mxu0 0
  %207 = vmatpush1.bf16.msra.mxu0 0
  %208 = vmatprep.subr.bf16.mxu0 0
  %209 = vmatpush1.bf16.msra.mxu0 0
  %210 = vmatprep.subr.bf16.mxu0 0
  %211 = vmatpush1.bf16.msra.mxu0 0
  %212 = vmatprep.subr.bf16.mxu0 0
  %213 = vmatpush1.bf16.msra.mxu0 0
  %214 = vmatprep.subr.bf16.mxu0 0
  %215 = vmatpush1.bf16.msra.mxu0 0
  %216 = vmatprep.subr.bf16.mxu0 0
  %217 = vmatpush1.bf16.msra.mxu0 0
  %218 = vmatprep.subr.bf16.mxu0 0
  %219 = vmatpush1.bf16.msra.mxu0 0
  %220 = vmatprep.subr.bf16.mxu0 0
  %221 = vmatpush1.bf16.msra.mxu0 0
  %222 = vmatprep.subr.bf16.mxu0 0
  %223 = vmatpush1.bf16.msra.mxu0 0
  %224 = vmatprep.subr.bf16.mxu0 0
  %225 = vmatpush1.bf16.msra.mxu0 0
  %226 = vmatprep.mubr.bf16.mxu0 0
  %227 = vmatmul.mubr.bf16.gmra.mrb[0].mxu0 %v192
  %v228 = vpop.f32.mrb[0].mxu0
  %v229 = vadd.f32 0.0, %v228
  %v230 = vpop.f32.mrb[0].mxu0
  %v231 = vpop.f32.mrb[0].mxu0
  %v232 = vpop.f32.mrb[0].mxu0
  %233 = vdwg.mxu0
  %v238 = vunpack.c.l.b16 %v118
  %v239 = vunpack.c.l.b16 %v119
  %v240 = vunpack.c.l.b16 %v120
  %v241 = vunpack.c.l.b16 %v121
  %v242 = vpack.c.b16 %v239, %v238
  %v243 = vpack.c.b16 %v241, %v240
  %v247 = vsel %vm190, %v122, 0
  %249 = vmatprep.subr.bf16.mxu0 0
  %250 = vmatpush1.bf16.msra.mxu0 %v242
  %251 = vmatprep.subr.bf16.mxu0 0
  %252 = vmatpush1.bf16.msra.mxu0 %v243
  %253 = vmatprep.subr.bf16.mxu0 0
  %254 = vmatpush1.bf16.msra.mxu0 0
  %255 = vmatprep.subr.bf16.mxu0 0
  %256 = vmatpush1.bf16.msra.mxu0 0
  %257 = vmatprep.subr.bf16.mxu0 0
  %258 = vmatpush1.bf16.msra.mxu0 0
  %259 = vmatprep.subr.bf16.mxu0 0
  %260 = vmatpush1.bf16.msra.mxu0 0
  %261 = vmatprep.subr.bf16.mxu0 0
  %262 = vmatpush1.bf16.msra.mxu0 0
  %263 = vmatprep.subr.bf16.mxu0 0
  %264 = vmatpush1.bf16.msra.mxu0 0
  %265 = vmatprep.subr.bf16.mxu0 0
  %266 = vmatpush1.bf16.msra.mxu0 0
  %267 = vmatprep.subr.bf16.mxu0 0
  %268 = vmatpush1.bf16.msra.mxu0 0
  %269 = vmatprep.subr.bf16.mxu0 0
  %270 = vmatpush1.bf16.msra.mxu0 0
  %271 = vmatprep.subr.bf16.mxu0 0
  %272 = vmatpush1.bf16.msra.mxu0 0
  %273 = vmatprep.subr.bf16.mxu0 0
  %274 = vmatpush1.bf16.msra.mxu0 0
  %275 = vmatprep.subr.bf16.mxu0 0
  %276 = vmatpush1.bf16.msra.mxu0 0
  %277 = vmatprep.subr.bf16.mxu0 0
  %278 = vmatpush1.bf16.msra.mxu0 0
  %279 = vmatprep.subr.bf16.mxu0 0
  %280 = vmatpush1.bf16.msra.mxu0 0
  %281 = vmatprep.mubr.bf16.mxu0 0
  %282 = vmatmul.mubr.bf16.gmra.mrb[0].mxu0 %v247
  %v283 = vpop.f32.mrb[0].mxu0
  %v284 = vadd.f32 %v229, %v283
  %v285 = vpop.f32.mrb[0].mxu0
  %v286 = vpop.f32.mrb[0].mxu0
  %v287 = vpop.f32.mrb[0].mxu0
  %288 = vdwg.mxu0
  %289 = vset.pattern.permute.xlu0 2
  %290 = vperm.xlu0 %289, %v38
  %v291 = vpop.permute.xlu0 %290
  %vm292 = vcmp.eq.s32.totalorder %v291, %v49
  %v293 = vsel %vm292, 1, 0
  %v294 = vcvt.s32.f32 %v293
  %v295 = vpack.c.bf16 %v294, %v294
  %v297 = vsel %vm70, %v295, 0
  %299 = vmatprep.subr.bf16.mxu0 0
  %300 = vmatpush1.bf16.msra.mxu0 %v67
  %301 = vmatprep.subr.bf16.mxu0 0
  %302 = vmatpush1.bf16.msra.mxu0 %v76
  %303 = vmatprep.subr.bf16.mxu0 0
  %304 = vmatpush1.bf16.msra.mxu0 0
  %305 = vmatprep.subr.bf16.mxu0 0
  %306 = vmatpush1.bf16.msra.mxu0 0
  %307 = vmatprep.subr.bf16.mxu0 0
  %308 = vmatpush1.bf16.msra.mxu0 0
  %309 = vmatprep.subr.bf16.mxu0 0
  %310 = vmatpush1.bf16.msra.mxu0 0
  %311 = vmatprep.subr.bf16.mxu0 0
  %312 = vmatpush1.bf16.msra.mxu0 0
  %313 = vmatprep.subr.bf16.mxu0 0
  %314 = vmatpush1.bf16.msra.mxu0 0
  %315 = vmatprep.subr.bf16.mxu0 0
  %316 = vmatpush1.bf16.msra.mxu0 0
  %317 = vmatprep.subr.bf16.mxu0 0
  %318 = vmatpush1.bf16.msra.mxu0 0
  %319 = vmatprep.subr.bf16.mxu0 0
  %320 = vmatpush1.bf16.msra.mxu0 0
  %321 = vmatprep.subr.bf16.mxu0 0
  %322 = vmatpush1.bf16.msra.mxu0 0
  %323 = vmatprep.subr.bf16.mxu0 0
  %324 = vmatpush1.bf16.msra.mxu0 0
  %325 = vmatprep.subr.bf16.mxu0 0
  %326 = vmatpush1.bf16.msra.mxu0 0
  %327 = vmatprep.subr.bf16.mxu0 0
  %328 = vmatpush1.bf16.msra.mxu0 0
  %329 = vmatprep.subr.bf16.mxu0 0
  %330 = vmatpush1.bf16.msra.mxu0 0
  %331 = vmatprep.mubr.bf16.mxu0 0
  %332 = vmatmul.mubr.bf16.gmra.mrb[0].mxu0 %v297
  %v333 = vpop.f32.mrb[0].mxu0
  %v334 = vadd.f32 0.0, %v333
  %v335 = vpop.f32.mrb[0].mxu0
  %v336 = vpop.f32.mrb[0].mxu0
  %v337 = vpop.f32.mrb[0].mxu0
  %338 = vdwg.mxu0
  %v339 = vld [vmem:[%s4 + $0x20] sm:$0xf]
  %v340 = vld [vmem:[%s4 + $0x24] sm:$0xf]
  %v341 = vld [vmem:[%s4 + $0x28] sm:$0xf]
  %v342 = vld [vmem:[%s4 + $0x2c] sm:$0xf]
  %v343 = vpack.c.bf16 %v334, %v334
  %v348 = vunpack.c.l.b16 %v339
  %v349 = vunpack.c.l.b16 %v340
  %v350 = vunpack.c.l.b16 %v341
  %v351 = vunpack.c.l.b16 %v342
  %v352 = vpack.c.b16 %v349, %v348
  %v353 = vpack.c.b16 %v351, %v350
  %v357 = vsel %vm190, %v343, 0
  %359 = vmatprep.subr.bf16.mxu0 0
  %360 = vmatpush1.bf16.msra.mxu0 %v352
  %361 = vmatprep.subr.bf16.mxu0 0
  %362 = vmatpush1.bf16.msra.mxu0 %v353
  %363 = vmatprep.subr.bf16.mxu0 0
  %364 = vmatpush1.bf16.msra.mxu0 0
  %365 = vmatprep.subr.bf16.mxu0 0
  %366 = vmatpush1.bf16.msra.mxu0 0
  %367 = vmatprep.subr.bf16.mxu0 0
  %368 = vmatpush1.bf16.msra.mxu0 0
  %369 = vmatprep.subr.bf16.mxu0 0
  %370 = vmatpush1.bf16.msra.mxu0 0
  %371 = vmatprep.subr.bf16.mxu0 0
  %372 = vmatpush1.bf16.msra.mxu0 0
  %373 = vmatprep.subr.bf16.mxu0 0
  %374 = vmatpush1.bf16.msra.mxu0 0
  %375 = vmatprep.subr.bf16.mxu0 0
  %376 = vmatpush1.bf16.msra.mxu0 0
  %377 = vmatprep.subr.bf16.mxu0 0
  %378 = vmatpush1.bf16.msra.mxu0 0
  %379 = vmatprep.subr.bf16.mxu0 0
  %380 = vmatpush1.bf16.msra.mxu0 0
  %381 = vmatprep.subr.bf16.mxu0 0
  %382 = vmatpush1.bf16.msra.mxu0 0
  %383 = vmatprep.subr.bf16.mxu0 0
  %384 = vmatpush1.bf16.msra.mxu0 0
  %385 = vmatprep.subr.bf16.mxu0 0
  %386 = vmatpush1.bf16.msra.mxu0 0
  %387 = vmatprep.subr.bf16.mxu0 0
  %388 = vmatpush1.bf16.msra.mxu0 0
  %389 = vmatprep.subr.bf16.mxu0 0
  %390 = vmatpush1.bf16.msra.mxu0 0
  %391 = vmatprep.mubr.bf16.mxu0 0
  %392 = vmatmul.mubr.bf16.gmra.mrb[0].mxu0 %v357
  %v393 = vpop.f32.mrb[0].mxu0
  %v394 = vadd.f32 0.0, %v393
  %v395 = vpop.f32.mrb[0].mxu0
  %v396 = vpop.f32.mrb[0].mxu0
  %v397 = vpop.f32.mrb[0].mxu0
  %398 = vdwg.mxu0
  %v399 = vadd.f32 %v284, %v394
  %400 = vset.pattern.permute.xlu0 3
  %401 = vperm.xlu0 %400, %v38
  %v402 = vpop.permute.xlu0 %401
  %vm403 = vcmp.eq.s32.totalorder %v402, %v49
  %v404 = vsel %vm403, 1, 0
  %v405 = vcvt.s32.f32 %v404
  %v406 = vpack.c.bf16 %v405, %v405
  %v408 = vsel %vm70, %v406, 0
  %410 = vmatprep.subr.bf16.mxu0 0
  %411 = vmatpush1.bf16.msra.mxu0 %v67
  %412 = vmatprep.subr.bf16.mxu0 0
  %413 = vmatpush1.bf16.msra.mxu0 %v76
  %414 = vmatprep.subr.bf16.mxu0 0
  %415 = vmatpush1.bf16.msra.mxu0 0
  %416 = vmatprep.subr.bf16.mxu0 0
  %417 = vmatpush1.bf16.msra.mxu0 0
  %418 = vmatprep.subr.bf16.mxu0 0
  %419 = vmatpush1.bf16.msra.mxu0 0
  %420 = vmatprep.subr.bf16.mxu0 0
  %421 = vmatpush1.bf16.msra.mxu0 0
  %422 = vmatprep.subr.bf16.mxu0 0
  %423 = vmatpush1.bf16.msra.mxu0 0
  %424 = vmatprep.subr.bf16.mxu0 0
  %425 = vmatpush1.bf16.msra.mxu0 0
  %426 = vmatprep.subr.bf16.mxu0 0
  %427 = vmatpush1.bf16.msra.mxu0 0
  %428 = vmatprep.subr.bf16.mxu0 0
  %429 = vmatpush1.bf16.msra.mxu0 0
  %430 = vmatprep.subr.bf16.mxu0 0
  %431 = vmatpush1.bf16.msra.mxu0 0
  %432 = vmatprep.subr.bf16.mxu0 0
  %433 = vmatpush1.bf16.msra.mxu0 0
  %434 = vmatprep.subr.bf16.mxu0 0
  %435 = vmatpush1.bf16.msra.mxu0 0
  %436 = vmatprep.subr.bf16.mxu0 0
  %437 = vmatpush1.bf16.msra.mxu0 0
  %438 = vmatprep.subr.bf16.mxu0 0
  %439 = vmatpush1.bf16.msra.mxu0 0
  %440 = vmatprep.subr.bf16.mxu0 0
  %441 = vmatpush1.bf16.msra.mxu0 0
  %442 = vmatprep.mubr.bf16.mxu0 0
  %443 = vmatmul.mubr.bf16.gmra.mrb[0].mxu0 %v408
  %v444 = vpop.f32.mrb[0].mxu0
  %v445 = vadd.f32 0.0, %v444
  %v446 = vpop.f32.mrb[0].mxu0
  %v447 = vpop.f32.mrb[0].mxu0
  %v448 = vpop.f32.mrb[0].mxu0
  %449 = vdwg.mxu0
  %v450 = vld [vmem:[%s4 + $0x30] sm:$0xf]
  %v451 = vld [vmem:[%s4 + $0x34] sm:$0xf]
  %v452 = vld [vmem:[%s4 + $0x38] sm:$0xf]
  %v453 = vld [vmem:[%s4 + $0x3c] sm:$0xf]
  %v454 = vpack.c.bf16 %v445, %v445
  %v459 = vunpack.c.l.b16 %v450
  %v460 = vunpack.c.l.b16 %v451
  %v461 = vunpack.c.l.b16 %v452
  %v462 = vunpack.c.l.b16 %v453
  %v463 = vpack.c.b16 %v460, %v459
  %v464 = vpack.c.b16 %v462, %v461
  %v468 = vsel %vm190, %v454, 0
  %470 = vmatprep.subr.bf16.mxu0 0
  %471 = vmatpush1.bf16.msra.mxu0 %v463
  %472 = vmatprep.subr.bf16.mxu0 0
  %473 = vmatpush1.bf16.msra.mxu0 %v464
  %474 = vmatprep.subr.bf16.mxu0 0
  %475 = vmatpush1.bf16.msra.mxu0 0
  %476 = vmatprep.subr.bf16.mxu0 0
  %477 = vmatpush1.bf16.msra.mxu0 0
  %478 = vmatprep.subr.bf16.mxu0 0
  %479 = vmatpush1.bf16.msra.mxu0 0
  %480 = vmatprep.subr.bf16.mxu0 0
  %481 = vmatpush1.bf16.msra.mxu0 0
  %482 = vmatprep.subr.bf16.mxu0 0
  %483 = vmatpush1.bf16.msra.mxu0 0
  %484 = vmatprep.subr.bf16.mxu0 0
  %485 = vmatpush1.bf16.msra.mxu0 0
  %486 = vmatprep.subr.bf16.mxu0 0
  %487 = vmatpush1.bf16.msra.mxu0 0
  %488 = vmatprep.subr.bf16.mxu0 0
  %489 = vmatpush1.bf16.msra.mxu0 0
  %490 = vmatprep.subr.bf16.mxu0 0
  %491 = vmatpush1.bf16.msra.mxu0 0
  %492 = vmatprep.subr.bf16.mxu0 0
  %493 = vmatpush1.bf16.msra.mxu0 0
  %494 = vmatprep.subr.bf16.mxu0 0
  %495 = vmatpush1.bf16.msra.mxu0 0
  %496 = vmatprep.subr.bf16.mxu0 0
  %497 = vmatpush1.bf16.msra.mxu0 0
  %498 = vmatprep.subr.bf16.mxu0 0
  %499 = vmatpush1.bf16.msra.mxu0 0
  %500 = vmatprep.subr.bf16.mxu0 0
  %501 = vmatpush1.bf16.msra.mxu0 0
  %502 = vmatprep.mubr.bf16.mxu0 0
  %503 = vmatmul.mubr.bf16.gmra.mrb[0].mxu0 %v468
  %v504 = vpop.f32.mrb[0].mxu0
  %v505 = vadd.f32 0.0, %v504
  %v506 = vpop.f32.mrb[0].mxu0
  %v507 = vpop.f32.mrb[0].mxu0
  %v508 = vpop.f32.mrb[0].mxu0
  %509 = vdwg.mxu0
  %v510 = vadd.f32 %v399, %v505
  %511 = vset.pattern.permute.xlu0 4
  %512 = vperm.xlu0 %511, %v38
  %v513 = vpop.permute.xlu0 %512
  %vm514 = vcmp.eq.s32.totalorder %v513, %v49
  %v515 = vsel %vm514, 1, 0
  %v516 = vcvt.s32.f32 %v515
  %v517 = vpack.c.bf16 %v516, %v516
  %v519 = vsel %vm70, %v517, 0
  %521 = vmatprep.subr.bf16.mxu0 0
  %522 = vmatpush1.bf16.msra.mxu0 %v67
  %523 = vmatprep.subr.bf16.mxu0 0
  %524 = vmatpush1.bf16.msra.mxu0 %v76
  %525 = vmatprep.subr.bf16.mxu0 0
  %526 = vmatpush1.bf16.msra.mxu0 0
  %527 = vmatprep.subr.bf16.mxu0 0
  %528 = vmatpush1.bf16.msra.mxu0 0
  %529 = vmatprep.subr.bf16.mxu0 0
  %530 = vmatpush1.bf16.msra.mxu0 0
  %531 = vmatprep.subr.bf16.mxu0 0
  %532 = vmatpush1.bf16.msra.mxu0 0
  %533 = vmatprep.subr.bf16.mxu0 0
  %534 = vmatpush1.bf16.msra.mxu0 0
  %535 = vmatprep.subr.bf16.mxu0 0
  %536 = vmatpush1.bf16.msra.mxu0 0
  %537 = vmatprep.subr.bf16.mxu0 0
  %538 = vmatpush1.bf16.msra.mxu0 0
  %539 = vmatprep.subr.bf16.mxu0 0
  %540 = vmatpush1.bf16.msra.mxu0 0
  %541 = vmatprep.subr.bf16.mxu0 0
  %542 = vmatpush1.bf16.msra.mxu0 0
  %543 = vmatprep.subr.bf16.mxu0 0
  %544 = vmatpush1.bf16.msra.mxu0 0
  %545 = vmatprep.subr.bf16.mxu0 0
  %546 = vmatpush1.bf16.msra.mxu0 0
  %547 = vmatprep.subr.bf16.mxu0 0
  %548 = vmatpush1.bf16.msra.mxu0 0
  %549 = vmatprep.subr.bf16.mxu0 0
  %550 = vmatpush1.bf16.msra.mxu0 0
  %551 = vmatprep.subr.bf16.mxu0 0
  %552 = vmatpush1.bf16.msra.mxu0 0
  %553 = vmatprep.mubr.bf16.mxu0 0
  %554 = vmatmul.mubr.bf16.gmra.mrb[0].mxu0 %v519
  %v555 = vpop.f32.mrb[0].mxu0
  %v556 = vadd.f32 0.0, %v555
  %v557 = vpop.f32.mrb[0].mxu0
  %v558 = vpop.f32.mrb[0].mxu0
  %v559 = vpop.f32.mrb[0].mxu0
  %560 = vdwg.mxu0
  %v561 = vld [vmem:[%s4 + $0x40] sm:$0xf]
  %v562 = vld [vmem:[%s4 + $0x44] sm:$0xf]
  %v563 = vld [vmem:[%s4 + $0x48] sm:$0xf]
  %v564 = vld [vmem:[%s4 + $0x4c] sm:$0xf]
  %v565 = vpack.c.bf16 %v556, %v556
  %v570 = vunpack.c.l.b16 %v561
  %v571 = vunpack.c.l.b16 %v562
  %v572 = vunpack.c.l.b16 %v563
  %v573 = vunpack.c.l.b16 %v564
  %v574 = vpack.c.b16 %v571, %v570
  %v575 = vpack.c.b16 %v573, %v572
  %v579 = vsel %vm190, %v565, 0
  %581 = vmatprep.subr.bf16.mxu0 0
  %582 = vmatpush1.bf16.msra.mxu0 %v574
  %583 = vmatprep.subr.bf16.mxu0 0
  %584 = vmatpush1.bf16.msra.mxu0 %v575
  %585 = vmatprep.subr.bf16.mxu0 0
  %586 = vmatpush1.bf16.msra.mxu0 0
  %587 = vmatprep.subr.bf16.mxu0 0
  %588 = vmatpush1.bf16.msra.mxu0 0
  %589 = vmatprep.subr.bf16.mxu0 0
  %590 = vmatpush1.bf16.msra.mxu0 0
  %591 = vmatprep.subr.bf16.mxu0 0
  %592 = vmatpush1.bf16.msra.mxu0 0
  %593 = vmatprep.subr.bf16.mxu0 0
  %594 = vmatpush1.bf16.msra.mxu0 0
  %595 = vmatprep.subr.bf16.mxu0 0
  %596 = vmatpush1.bf16.msra.mxu0 0
  %597 = vmatprep.subr.bf16.mxu0 0
  %598 = vmatpush1.bf16.msra.mxu0 0
  %599 = vmatprep.subr.bf16.mxu0 0
  %600 = vmatpush1.bf16.msra.mxu0 0
  %601 = vmatprep.subr.bf16.mxu0 0
  %602 = vmatpush1.bf16.msra.mxu0 0
  %603 = vmatprep.subr.bf16.mxu0 0
  %604 = vmatpush1.bf16.msra.mxu0 0
  %605 = vmatprep.subr.bf16.mxu0 0
  %606 = vmatpush1.bf16.msra.mxu0 0
  %607 = vmatprep.subr.bf16.mxu0 0
  %608 = vmatpush1.bf16.msra.mxu0 0
  %609 = vmatprep.subr.bf16.mxu0 0
  %610 = vmatpush1.bf16.msra.mxu0 0
  %611 = vmatprep.subr.bf16.mxu0 0
  %612 = vmatpush1.bf16.msra.mxu0 0
  %613 = vmatprep.mubr.bf16.mxu0 0
  %614 = vmatmul.mubr.bf16.gmra.mrb[0].mxu0 %v579
  %v615 = vpop.f32.mrb[0].mxu0
  %v616 = vadd.f32 0.0, %v615
  %v617 = vpop.f32.mrb[0].mxu0
  %v618 = vpop.f32.mrb[0].mxu0
  %v619 = vpop.f32.mrb[0].mxu0
  %620 = vdwg.mxu0
  %v621 = vadd.f32 %v510, %v616
  %622 = vset.pattern.permute.xlu0 5
  %623 = vperm.xlu0 %622, %v38
  %v624 = vpop.permute.xlu0 %623
  %vm625 = vcmp.eq.s32.totalorder %v624, %v49
  %v626 = vsel %vm625, 1, 0
  %v627 = vcvt.s32.f32 %v626
  %v628 = vpack.c.bf16 %v627, %v627
  %v630 = vsel %vm70, %v628, 0
  %632 = vmatprep.subr.bf16.mxu0 0
  %633 = vmatpush1.bf16.msra.mxu0 %v67
  %634 = vmatprep.subr.bf16.mxu0 0
  %635 = vmatpush1.bf16.msra.mxu0 %v76
  %636 = vmatprep.subr.bf16.mxu0 0
  %637 = vmatpush1.bf16.msra.mxu0 0
  %638 = vmatprep.subr.bf16.mxu0 0
  %639 = vmatpush1.bf16.msra.mxu0 0
  %640 = vmatprep.subr.bf16.mxu0 0
  %641 = vmatpush1.bf16.msra.mxu0 0
  %642 = vmatprep.subr.bf16.mxu0 0
  %643 = vmatpush1.bf16.msra.mxu0 0
  %644 = vmatprep.subr.bf16.mxu0 0
  %645 = vmatpush1.bf16.msra.mxu0 0
  %646 = vmatprep.subr.bf16.mxu0 0
  %647 = vmatpush1.bf16.msra.mxu0 0
  %648 = vmatprep.subr.bf16.mxu0 0
  %649 = vmatpush1.bf16.msra.mxu0 0
  %650 = vmatprep.subr.bf16.mxu0 0
  %651 = vmatpush1.bf16.msra.mxu0 0
  %652 = vmatprep.subr.bf16.mxu0 0
  %653 = vmatpush1.bf16.msra.mxu0 0
  %654 = vmatprep.subr.bf16.mxu0 0
  %655 = vmatpush1.bf16.msra.mxu0 0
  %656 = vmatprep.subr.bf16.mxu0 0
  %657 = vmatpush1.bf16.msra.mxu0 0
  %658 = vmatprep.subr.bf16.mxu0 0
  %659 = vmatpush1.bf16.msra.mxu0 0
  %660 = vmatprep.subr.bf16.mxu0 0
  %661 = vmatpush1.bf16.msra.mxu0 0
  %662 = vmatprep.subr.bf16.mxu0 0
  %663 = vmatpush1.bf16.msra.mxu0 0
  %664 = vmatprep.mubr.bf16.mxu0 0
  %665 = vmatmul.mubr.bf16.gmra.mrb[0].mxu0 %v630
  %v666 = vpop.f32.mrb[0].mxu0
  %v667 = vadd.f32 0.0, %v666
  %v668 = vpop.f32.mrb[0].mxu0
  %v669 = vpop.f32.mrb[0].mxu0
  %v670 = vpop.f32.mrb[0].mxu0
  %671 = vdwg.mxu0
  %v672 = vld [vmem:[%s4 + $0x50] sm:$0xf]
  %v673 = vld [vmem:[%s4 + $0x54] sm:$0xf]
  %v674 = vld [vmem:[%s4 + $0x58] sm:$0xf]
  %v675 = vld [vmem:[%s4 + $0x5c] sm:$0xf]
  %v676 = vpack.c.bf16 %v667, %v667
  %v681 = vunpack.c.l.b16 %v672
  %v682 = vunpack.c.l.b16 %v673
  %v683 = vunpack.c.l.b16 %v674
  %v684 = vunpack.c.l.b16 %v675
  %v685 = vpack.c.b16 %v682, %v681
  %v686 = vpack.c.b16 %v684, %v683
  %v690 = vsel %vm190, %v676, 0
  %692 = vmatprep.subr.bf16.mxu0 0
  %693 = vmatpush1.bf16.msra.mxu0 %v685
  %694 = vmatprep.subr.bf16.mxu0 0
  %695 = vmatpush1.bf16.msra.mxu0 %v686
  %696 = vmatprep.subr.bf16.mxu0 0
  %697 = vmatpush1.bf16.msra.mxu0 0
  %698 = vmatprep.subr.bf16.mxu0 0
  %699 = vmatpush1.bf16.msra.mxu0 0
  %700 = vmatprep.subr.bf16.mxu0 0
  %701 = vmatpush1.bf16.msra.mxu0 0
  %702 = vmatprep.subr.bf16.mxu0 0
  %703 = vmatpush1.bf16.msra.mxu0 0
  %704 = vmatprep.subr.bf16.mxu0 0
  %705 = vmatpush1.bf16.msra.mxu0 0
  %706 = vmatprep.subr.bf16.mxu0 0
  %707 = vmatpush1.bf16.msra.mxu0 0
  %708 = vmatprep.subr.bf16.mxu0 0
  %709 = vmatpush1.bf16.msra.mxu0 0
  %710 = vmatprep.subr.bf16.mxu0 0
  %711 = vmatpush1.bf16.msra.mxu0 0
  %712 = vmatprep.subr.bf16.mxu0 0
  %713 = vmatpush1.bf16.msra.mxu0 0
  %714 = vmatprep.subr.bf16.mxu0 0
  %715 = vmatpush1.bf16.msra.mxu0 0
  %716 = vmatprep.subr.bf16.mxu0 0
  %717 = vmatpush1.bf16.msra.mxu0 0
  %718 = vmatprep.subr.bf16.mxu0 0
  %719 = vmatpush1.bf16.msra.mxu0 0
  %720 = vmatprep.subr.bf16.mxu0 0
  %721 = vmatpush1.bf16.msra.mxu0 0
  %722 = vmatprep.subr.bf16.mxu0 0
  %723 = vmatpush1.bf16.msra.mxu0 0
  %724 = vmatprep.mubr.bf16.mxu0 0
  %725 = vmatmul.mubr.bf16.gmra.mrb[0].mxu0 %v690
  %v726 = vpop.f32.mrb[0].mxu0
  %v727 = vadd.f32 0.0, %v726
  %v728 = vpop.f32.mrb[0].mxu0
  %v729 = vpop.f32.mrb[0].mxu0
  %v730 = vpop.f32.mrb[0].mxu0
  %731 = vdwg.mxu0
  %v732 = vadd.f32 %v621, %v727
  %733 = vset.pattern.permute.xlu0 6
  %734 = vperm.xlu0 %733, %v38
  %v735 = vpop.permute.xlu0 %734
  %vm736 = vcmp.eq.s32.totalorder %v735, %v49
  %v737 = vsel %vm736, 1, 0
  %v738 = vcvt.s32.f32 %v737
  %v739 = vpack.c.bf16 %v738, %v738
  %v741 = vsel %vm70, %v739, 0
  %743 = vmatprep.subr.bf16.mxu0 0
  %744 = vmatpush1.bf16.msra.mxu0 %v67
  %745 = vmatprep.subr.bf16.mxu0 0
  %746 = vmatpush1.bf16.msra.mxu0 %v76
  %747 = vmatprep.subr.bf16.mxu0 0
  %748 = vmatpush1.bf16.msra.mxu0 0
  %749 = vmatprep.subr.bf16.mxu0 0
  %750 = vmatpush1.bf16.msra.mxu0 0
  %751 = vmatprep.subr.bf16.mxu0 0
  %752 = vmatpush1.bf16.msra.mxu0 0
  %753 = vmatprep.subr.bf16.mxu0 0
  %754 = vmatpush1.bf16.msra.mxu0 0
  %755 = vmatprep.subr.bf16.mxu0 0
  %756 = vmatpush1.bf16.msra.mxu0 0
  %757 = vmatprep.subr.bf16.mxu0 0
  %758 = vmatpush1.bf16.msra.mxu0 0
  %759 = vmatprep.subr.bf16.mxu0 0
  %760 = vmatpush1.bf16.msra.mxu0 0
  %761 = vmatprep.subr.bf16.mxu0 0
  %762 = vmatpush1.bf16.msra.mxu0 0
  %763 = vmatprep.subr.bf16.mxu0 0
  %764 = vmatpush1.bf16.msra.mxu0 0
  %765 = vmatprep.subr.bf16.mxu0 0
  %766 = vmatpush1.bf16.msra.mxu0 0
  %767 = vmatprep.subr.bf16.mxu0 0
  %768 = vmatpush1.bf16.msra.mxu0 0
  %769 = vmatprep.subr.bf16.mxu0 0
  %770 = vmatpush1.bf16.msra.mxu0 0
  %771 = vmatprep.subr.bf16.mxu0 0
  %772 = vmatpush1.bf16.msra.mxu0 0
  %773 = vmatprep.subr.bf16.mxu0 0
  %774 = vmatpush1.bf16.msra.mxu0 0
  %775 = vmatprep.mubr.bf16.mxu0 0
  %776 = vmatmul.mubr.bf16.gmra.mrb[0].mxu0 %v741
  %v777 = vpop.f32.mrb[0].mxu0
  %v778 = vadd.f32 0.0, %v777
  %v779 = vpop.f32.mrb[0].mxu0
  %v780 = vpop.f32.mrb[0].mxu0
  %v781 = vpop.f32.mrb[0].mxu0
  %782 = vdwg.mxu0
  %v783 = vld [vmem:[%s4 + $0x60] sm:$0xf]
  %v784 = vld [vmem:[%s4 + $0x64] sm:$0xf]
  %v785 = vld [vmem:[%s4 + $0x68] sm:$0xf]
  %v786 = vld [vmem:[%s4 + $0x6c] sm:$0xf]
  %v787 = vpack.c.bf16 %v778, %v778
  %v792 = vunpack.c.l.b16 %v783
  %v793 = vunpack.c.l.b16 %v784
  %v794 = vunpack.c.l.b16 %v785
  %v795 = vunpack.c.l.b16 %v786
  %v796 = vpack.c.b16 %v793, %v792
  %v797 = vpack.c.b16 %v795, %v794
  %v801 = vsel %vm190, %v787, 0
  %803 = vmatprep.subr.bf16.mxu0 0
  %804 = vmatpush1.bf16.msra.mxu0 %v796
  %805 = vmatprep.subr.bf16.mxu0 0
  %806 = vmatpush1.bf16.msra.mxu0 %v797
  %807 = vmatprep.subr.bf16.mxu0 0
  %808 = vmatpush1.bf16.msra.mxu0 0
  %809 = vmatprep.subr.bf16.mxu0 0
  %810 = vmatpush1.bf16.msra.mxu0 0
  %811 = vmatprep.subr.bf16.mxu0 0
  %812 = vmatpush1.bf16.msra.mxu0 0
  %813 = vmatprep.subr.bf16.mxu0 0
  %814 = vmatpush1.bf16.msra.mxu0 0
  %815 = vmatprep.subr.bf16.mxu0 0
  %816 = vmatpush1.bf16.msra.mxu0 0
  %817 = vmatprep.subr.bf16.mxu0 0
  %818 = vmatpush1.bf16.msra.mxu0 0
  %819 = vmatprep.subr.bf16.mxu0 0
  %820 = vmatpush1.bf16.msra.mxu0 0
  %821 = vmatprep.subr.bf16.mxu0 0
  %822 = vmatpush1.bf16.msra.mxu0 0
  %823 = vmatprep.subr.bf16.mxu0 0
  %824 = vmatpush1.bf16.msra.mxu0 0
  %825 = vmatprep.subr.bf16.mxu0 0
  %826 = vmatpush1.bf16.msra.mxu0 0
  %827 = vmatprep.subr.bf16.mxu0 0
  %828 = vmatpush1.bf16.msra.mxu0 0
  %829 = vmatprep.subr.bf16.mxu0 0
  %830 = vmatpush1.bf16.msra.mxu0 0
  %831 = vmatprep.subr.bf16.mxu0 0
  %832 = vmatpush1.bf16.msra.mxu0 0
  %833 = vmatprep.subr.bf16.mxu0 0
  %834 = vmatpush1.bf16.msra.mxu0 0
  %835 = vmatprep.mubr.bf16.mxu0 0
  %836 = vmatmul.mubr.bf16.gmra.mrb[0].mxu0 %v801
  %v837 = vpop.f32.mrb[0].mxu0
  %v838 = vadd.f32 0.0, %v837
  %v839 = vpop.f32.mrb[0].mxu0
  %v840 = vpop.f32.mrb[0].mxu0
  %v841 = vpop.f32.mrb[0].mxu0
  %842 = vdwg.mxu0
  %v843 = vadd.f32 %v732, %v838
  %844 = vset.pattern.permute.xlu0 7
  %845 = vperm.xlu0 %844, %v38
  %v846 = vpop.permute.xlu0 %845
  %vm847 = vcmp.eq.s32.totalorder %v846, %v49
  %v848 = vsel %vm847, 1, 0
  %v849 = vcvt.s32.f32 %v848
  %v850 = vpack.c.bf16 %v849, %v849
  %v852 = vsel %vm70, %v850, 0
  %854 = vmatprep.subr.bf16.mxu0 0
  %855 = vmatpush1.bf16.msra.mxu0 %v67
  %856 = vmatprep.subr.bf16.mxu0 0
  %857 = vmatpush1.bf16.msra.mxu0 %v76
  %858 = vmatprep.subr.bf16.mxu0 0
  %859 = vmatpush1.bf16.msra.mxu0 0
  %860 = vmatprep.subr.bf16.mxu0 0
  %861 = vmatpush1.bf16.msra.mxu0 0
  %862 = vmatprep.subr.bf16.mxu0 0
  %863 = vmatpush1.bf16.msra.mxu0 0
  %864 = vmatprep.subr.bf16.mxu0 0
  %865 = vmatpush1.bf16.msra.mxu0 0
  %866 = vmatprep.subr.bf16.mxu0 0
  %867 = vmatpush1.bf16.msra.mxu0 0
  %868 = vmatprep.subr.bf16.mxu0 0
  %869 = vmatpush1.bf16.msra.mxu0 0
  %870 = vmatprep.subr.bf16.mxu0 0
  %871 = vmatpush1.bf16.msra.mxu0 0
  %872 = vmatprep.subr.bf16.mxu0 0
  %873 = vmatpush1.bf16.msra.mxu0 0
  %874 = vmatprep.subr.bf16.mxu0 0
  %875 = vmatpush1.bf16.msra.mxu0 0
  %876 = vmatprep.subr.bf16.mxu0 0
  %877 = vmatpush1.bf16.msra.mxu0 0
  %878 = vmatprep.subr.bf16.mxu0 0
  %879 = vmatpush1.bf16.msra.mxu0 0
  %880 = vmatprep.subr.bf16.mxu0 0
  %881 = vmatpush1.bf16.msra.mxu0 0
  %882 = vmatprep.subr.bf16.mxu0 0
  %883 = vmatpush1.bf16.msra.mxu0 0
  %884 = vmatprep.subr.bf16.mxu0 0
  %885 = vmatpush1.bf16.msra.mxu0 0
  %886 = vmatprep.mubr.bf16.mxu0 0
  %887 = vmatmul.mubr.bf16.gmra.mrb[0].mxu0 %v852
  %v888 = vpop.f32.mrb[0].mxu0
  %v889 = vadd.f32 0.0, %v888
  %v890 = vpop.f32.mrb[0].mxu0
  %v891 = vpop.f32.mrb[0].mxu0
  %v892 = vpop.f32.mrb[0].mxu0
  %893 = vdwg.mxu0
  %v894 = vld [vmem:[%s4 + $0x70] sm:$0xf]
  %v895 = vld [vmem:[%s4 + $0x74] sm:$0xf]
  %v896 = vld [vmem:[%s4 + $0x78] sm:$0xf]
  %v897 = vld [vmem:[%s4 + $0x7c] sm:$0xf]
  %v898 = vpack.c.bf16 %v889, %v889
  %v903 = vunpack.c.l.b16 %v894
  %v904 = vunpack.c.l.b16 %v895
  %v905 = vunpack.c.l.b16 %v896
  %v906 = vunpack.c.l.b16 %v897
  %v907 = vpack.c.b16 %v904, %v903
  %v908 = vpack.c.b16 %v906, %v905
  %v912 = vsel %vm190, %v898, 0
  %914 = vmatprep.subr.bf16.mxu0 0
  %915 = vmatpush1.bf16.msra.mxu0 %v907
  %916 = vmatprep.subr.bf16.mxu0 0
  %917 = vmatpush1.bf16.msra.mxu0 %v908
  %918 = vmatprep.subr.bf16.mxu0 0
  %919 = vmatpush1.bf16.msra.mxu0 0
  %920 = vmatprep.subr.bf16.mxu0 0
  %921 = vmatpush1.bf16.msra.mxu0 0
  %922 = vmatprep.subr.bf16.mxu0 0
  %923 = vmatpush1.bf16.msra.mxu0 0
  %924 = vmatprep.subr.bf16.mxu0 0
  %925 = vmatpush1.bf16.msra.mxu0 0
  %926 = vmatprep.subr.bf16.mxu0 0
  %927 = vmatpush1.bf16.msra.mxu0 0
  %928 = vmatprep.subr.bf16.mxu0 0
  %929 = vmatpush1.bf16.msra.mxu0 0
  %930 = vmatprep.subr.bf16.mxu0 0
  %931 = vmatpush1.bf16.msra.mxu0 0
  %932 = vmatprep.subr.bf16.mxu0 0
  %933 = vmatpush1.bf16.msra.mxu0 0
  %934 = vmatprep.subr.bf16.mxu0 0
  %935 = vmatpush1.bf16.msra.mxu0 0
  %936 = vmatprep.subr.bf16.mxu0 0
  %937 = vmatpush1.bf16.msra.mxu0 0
  %938 = vmatprep.subr.bf16.mxu0 0
  %939 = vmatpush1.bf16.msra.mxu0 0
  %940 = vmatprep.subr.bf16.mxu0 0
  %941 = vmatpush1.bf16.msra.mxu0 0
  %942 = vmatprep.subr.bf16.mxu0 0
  %943 = vmatpush1.bf16.msra.mxu0 0
  %944 = vmatprep.subr.bf16.mxu0 0
  %945 = vmatpush1.bf16.msra.mxu0 0
  %946 = vmatprep.mubr.bf16.mxu0 0
  %947 = vmatmul.mubr.bf16.gmra.mrb[0].mxu0 %v912
  %v948 = vpop.f32.mrb[0].mxu0
  %v949 = vadd.f32 0.0, %v948
  %v950 = vpop.f32.mrb[0].mxu0
  %v951 = vpop.f32.mrb[0].mxu0
  %v952 = vpop.f32.mrb[0].mxu0
  %953 = vdwg.mxu0
  %v954 = vadd.f32 %v843, %v949
  %955 = vset.pattern.permute.xlu0 0
  %956 = vperm.xlu0 %955, %v39
  %v957 = vpop.permute.xlu0 %956
  %vm958 = vcmp.eq.s32.totalorder %v957, %v49
  %v959 = vsel %vm958, 1, 0
  %v960 = vcvt.s32.f32 %v959
  %v961 = vpack.c.bf16 %v960, %v960
  %v967 = vunpack.c.l.b16 %v43
  %v968 = vunpack.c.l.b16 %v44
  %v969 = vunpack.c.l.b16 %v45
  %v970 = vunpack.c.l.b16 %v46
  %v971 = vunpack.c.l.b16 %v47
  %v972 = vpack.c.b16 %v968, %v967
  %v973 = vpack.c.b16 %v970, %v969
  %v974 = vpack.c.b16 %v971, %v971
  %vm977 = vcmask 326656
  %v979 = vsel %vm977, %v961, 0
  %v982 = vsel %vm74, %v974, 0
  %984 = vmatprep.subr.bf16.mxu0 0
  %985 = vmatpush1.bf16.msra.mxu0 %v972
  %986 = vmatprep.subr.bf16.mxu0 0
  %987 = vmatpush1.bf16.msra.mxu0 %v973
  %988 = vmatprep.subr.bf16.mxu0 0
  %989 = vmatpush1.bf16.msra.mxu0 %v982
  %990 = vmatprep.subr.bf16.mxu0 0
  %991 = vmatpush1.bf16.msra.mxu0 0
  %992 = vmatprep.subr.bf16.mxu0 0
  %993 = vmatpush1.bf16.msra.mxu0 0
  %994 = vmatprep.subr.bf16.mxu0 0
  %995 = vmatpush1.bf16.msra.mxu0 0
  %996 = vmatprep.subr.bf16.mxu0 0
  %997 = vmatpush1.bf16.msra.mxu0 0
  %998 = vmatprep.subr.bf16.mxu0 0
  %999 = vmatpush1.bf16.msra.mxu0 0
  %1000 = vmatprep.subr.bf16.mxu0 0
  %1001 = vmatpush1.bf16.msra.mxu0 0
  %1002 = vmatprep.subr.bf16.mxu0 0
  %1003 = vmatpush1.bf16.msra.mxu0 0
  %1004 = vmatprep.subr.bf16.mxu0 0
  %1005 = vmatpush1.bf16.msra.mxu0 0
  %1006 = vmatprep.subr.bf16.mxu0 0
  %1007 = vmatpush1.bf16.msra.mxu0 0
  %1008 = vmatprep.subr.bf16.mxu0 0
  %1009 = vmatpush1.bf16.msra.mxu0 0
  %1010 = vmatprep.subr.bf16.mxu0 0
  %1011 = vmatpush1.bf16.msra.mxu0 0
  %1012 = vmatprep.subr.bf16.mxu0 0
  %1013 = vmatpush1.bf16.msra.mxu0 0
  %1014 = vmatprep.subr.bf16.mxu0 0
  %1015 = vmatpush1.bf16.msra.mxu0 0
  %1016 = vmatprep.mubr.bf16.mxu0 0
  %1017 = vmatmul.mubr.bf16.gmra.mrb[0].mxu0 %v979
  %v1018 = vpop.f32.mrb[0].mxu0
  %v1019 = vadd.f32 0.0, %v1018
  %v1020 = vpop.f32.mrb[0].mxu0
  %v1021 = vpop.f32.mrb[0].mxu0
  %v1022 = vpop.f32.mrb[0].mxu0
  %1023 = vdwg.mxu0
  %v1024 = vld [vmem:[%s4 + $0x80] sm:$0xf]
  %v1025 = vld [vmem:[%s4 + $0x84] sm:$0xf]
  %v1026 = vld [vmem:[%s4 + $0x88] sm:$0xf]
  %v1027 = vld [vmem:[%s4 + $0x8c] sm:$0xf]
  %v1028 = vpack.c.bf16 %v1019, %v1019
  %v1033 = vunpack.c.l.b16 %v1024
  %v1034 = vunpack.c.l.b16 %v1025
  %v1035 = vunpack.c.l.b16 %v1026
  %v1036 = vunpack.c.l.b16 %v1027
  %v1037 = vpack.c.b16 %v1034, %v1033
  %v1038 = vpack.c.b16 %v1036, %v1035
  %v1042 = vsel %vm190, %v1028, 0
  %1044 = vmatprep.subr.bf16.mxu0 0
  %1045 = vmatpush1.bf16.msra.mxu0 %v1037
  %1046 = vmatprep.subr.bf16.mxu0 0
  %1047 = vmatpush1.bf16.msra.mxu0 %v1038
  %1048 = vmatprep.subr.bf16.mxu0 0
  %1049 = vmatpush1.bf16.msra.mxu0 0
  %1050 = vmatprep.subr.bf16.mxu0 0
  %1051 = vmatpush1.bf16.msra.mxu0 0
  %1052 = vmatprep.subr.bf16.mxu0 0
  %1053 = vmatpush1.bf16.msra.mxu0 0
  %1054 = vmatprep.subr.bf16.mxu0 0
  %1055 = vmatpush1.bf16.msra.mxu0 0
  %1056 = vmatprep.subr.bf16.mxu0 0
  %1057 = vmatpush1.bf16.msra.mxu0 0
  %1058 = vmatprep.subr.bf16.mxu0 0
  %1059 = vmatpush1.bf16.msra.mxu0 0
  %1060 = vmatprep.subr.bf16.mxu0 0
  %1061 = vmatpush1.bf16.msra.mxu0 0
  %1062 = vmatprep.subr.bf16.mxu0 0
  %1063 = vmatpush1.bf16.msra.mxu0 0
  %1064 = vmatprep.subr.bf16.mxu0 0
  %1065 = vmatpush1.bf16.msra.mxu0 0
  %1066 = vmatprep.subr.bf16.mxu0 0
  %1067 = vmatpush1.bf16.msra.mxu0 0
  %1068 = vmatprep.subr.bf16.mxu0 0
  %1069 = vmatpush1.bf16.msra.mxu0 0
  %1070 = vmatprep.subr.bf16.mxu0 0
  %1071 = vmatpush1.bf16.msra.mxu0 0
  %1072 = vmatprep.subr.bf16.mxu0 0
  %1073 = vmatpush1.bf16.msra.mxu0 0
  %1074 = vmatprep.subr.bf16.mxu0 0
  %1075 = vmatpush1.bf16.msra.mxu0 0
  %1076 = vmatprep.mubr.bf16.mxu0 0
  %1077 = vmatmul.mubr.bf16.gmra.mrb[0].mxu0 %v1042
  %v1078 = vpop.f32.mrb[0].mxu0
  %v1079 = vadd.f32 0.0, %v1078
  %v1080 = vpop.f32.mrb[0].mxu0
  %v1081 = vpop.f32.mrb[0].mxu0
  %v1082 = vpop.f32.mrb[0].mxu0
  %1083 = vdwg.mxu0
  %v1084 = vadd.f32 %v954, %v1079
  %1085 = vset.pattern.permute.xlu0 1
  %1086 = vperm.xlu0 %1085, %v39
  %v1087 = vpop.permute.xlu0 %1086
  %vm1088 = vcmp.eq.s32.totalorder %v1087, %v49
  %v1089 = vsel %vm1088, 1, 0
  %v1090 = vcvt.s32.f32 %v1089
  %v1091 = vpack.c.bf16 %v1090, %v1090
  %v1093 = vsel %vm977, %v1091, 0
  %1095 = vmatprep.subr.bf16.mxu0 0
  %1096 = vmatpush1.bf16.msra.mxu0 %v972
  %1097 = vmatprep.subr.bf16.mxu0 0
  %1098 = vmatpush1.bf16.msra.mxu0 %v973
  %1099 = vmatprep.subr.bf16.mxu0 0
  %1100 = vmatpush1.bf16.msra.mxu0 %v982
  %1101 = vmatprep.subr.bf16.mxu0 0
  %1102 = vmatpush1.bf16.msra.mxu0 0
  %1103 = vmatprep.subr.bf16.mxu0 0
  %1104 = vmatpush1.bf16.msra.mxu0 0
  %1105 = vmatprep.subr.bf16.mxu0 0
  %1106 = vmatpush1.bf16.msra.mxu0 0
  %1107 = vmatprep.subr.bf16.mxu0 0
  %1108 = vmatpush1.bf16.msra.mxu0 0
  %1109 = vmatprep.subr.bf16.mxu0 0
  %1110 = vmatpush1.bf16.msra.mxu0 0
  %1111 = vmatprep.subr.bf16.mxu0 0
  %1112 = vmatpush1.bf16.msra.mxu0 0
  %1113 = vmatprep.subr.bf16.mxu0 0
  %1114 = vmatpush1.bf16.msra.mxu0 0
  %1115 = vmatprep.subr.bf16.mxu0 0
  %1116 = vmatpush1.bf16.msra.mxu0 0
  %1117 = vmatprep.subr.bf16.mxu0 0
  %1118 = vmatpush1.bf16.msra.mxu0 0
  %1119 = vmatprep.subr.bf16.mxu0 0
  %1120 = vmatpush1.bf16.msra.mxu0 0
  %1121 = vmatprep.subr.bf16.mxu0 0
  %1122 = vmatpush1.bf16.msra.mxu0 0
  %1123 = vmatprep.subr.bf16.mxu0 0
  %1124 = vmatpush1.bf16.msra.mxu0 0
  %1125 = vmatprep.subr.bf16.mxu0 0
  %1126 = vmatpush1.bf16.msra.mxu0 0
  %1127 = vmatprep.mubr.bf16.mxu0 0
  %1128 = vmatmul.mubr.bf16.gmra.mrb[0].mxu0 %v1093
  %v1129 = vpop.f32.mrb[0].mxu0
  %v1130 = vadd.f32 0.0, %v1129
  %v1131 = vpop.f32.mrb[0].mxu0
  %v1132 = vpop.f32.mrb[0].mxu0
  %v1133 = vpop.f32.mrb[0].mxu0
  %1134 = vdwg.mxu0
  %v1135 = vld [vmem:[%s4 + $0x90] sm:$0xf]
  %v1136 = vld [vmem:[%s4 + $0x94] sm:$0xf]
  %v1137 = vld [vmem:[%s4 + $0x98] sm:$0xf]
  %v1138 = vld [vmem:[%s4 + $0x9c] sm:$0xf]
  %v1139 = vpack.c.bf16 %v1130, %v1130
  %v1144 = vunpack.c.l.b16 %v1135
  %v1145 = vunpack.c.l.b16 %v1136
  %v1146 = vunpack.c.l.b16 %v1137
  %v1147 = vunpack.c.l.b16 %v1138
  %v1148 = vpack.c.b16 %v1145, %v1144
  %v1149 = vpack.c.b16 %v1147, %v1146
  %v1153 = vsel %vm190, %v1139, 0
  %1155 = vmatprep.subr.bf16.mxu0 0
  %1156 = vmatpush1.bf16.msra.mxu0 %v1148
  %1157 = vmatprep.subr.bf16.mxu0 0
  %1158 = vmatpush1.bf16.msra.mxu0 %v1149
  %1159 = vmatprep.subr.bf16.mxu0 0
  %1160 = vmatpush1.bf16.msra.mxu0 0
  %1161 = vmatprep.subr.bf16.mxu0 0
  %1162 = vmatpush1.bf16.msra.mxu0 0
  %1163 = vmatprep.subr.bf16.mxu0 0
  %1164 = vmatpush1.bf16.msra.mxu0 0
  %1165 = vmatprep.subr.bf16.mxu0 0
  %1166 = vmatpush1.bf16.msra.mxu0 0
  %1167 = vmatprep.subr.bf16.mxu0 0
  %1168 = vmatpush1.bf16.msra.mxu0 0
  %1169 = vmatprep.subr.bf16.mxu0 0
  %1170 = vmatpush1.bf16.msra.mxu0 0
  %1171 = vmatprep.subr.bf16.mxu0 0
  %1172 = vmatpush1.bf16.msra.mxu0 0
  %1173 = vmatprep.subr.bf16.mxu0 0
  %1174 = vmatpush1.bf16.msra.mxu0 0
  %1175 = vmatprep.subr.bf16.mxu0 0
  %1176 = vmatpush1.bf16.msra.mxu0 0
  %1177 = vmatprep.subr.bf16.mxu0 0
  %1178 = vmatpush1.bf16.msra.mxu0 0
  %1179 = vmatprep.subr.bf16.mxu0 0
  %1180 = vmatpush1.bf16.msra.mxu0 0
  %1181 = vmatprep.subr.bf16.mxu0 0
  %1182 = vmatpush1.bf16.msra.mxu0 0
  %1183 = vmatprep.subr.bf16.mxu0 0
  %1184 = vmatpush1.bf16.msra.mxu0 0
  %1185 = vmatprep.subr.bf16.mxu0 0
  %1186 = vmatpush1.bf16.msra.mxu0 0
  %1187 = vmatprep.mubr.bf16.mxu0 0
  %1188 = vmatmul.mubr.bf16.gmra.mrb[0].mxu0 %v1153
  %v1189 = vpop.f32.mrb[0].mxu0
  %v1190 = vadd.f32 0.0, %v1189
  %v1191 = vpop.f32.mrb[0].mxu0
  %v1192 = vpop.f32.mrb[0].mxu0
  %v1193 = vpop.f32.mrb[0].mxu0
  %1194 = vdwg.mxu0
  %v1195 = vadd.f32 %v1084, %v1190
  %1196 = vset.pattern.permute.xlu0 2
  %1197 = vperm.xlu0 %1196, %v39
  %v1198 = vpop.permute.xlu0 %1197
  %vm1199 = vcmp.eq.s32.totalorder %v1198, %v49
  %v1200 = vsel %vm1199, 1, 0
  %v1201 = vcvt.s32.f32 %v1200
  %v1202 = vpack.c.bf16 %v1201, %v1201
  %v1204 = vsel %vm977, %v1202, 0
  %1206 = vmatprep.subr.bf16.mxu0 0
  %1207 = vmatpush1.bf16.msra.mxu0 %v972
  %1208 = vmatprep.subr.bf16.mxu0 0
  %1209 = vmatpush1.bf16.msra.mxu0 %v973
  %1210 = vmatprep.subr.bf16.mxu0 0
  %1211 = vmatpush1.bf16.msra.mxu0 %v982
  %1212 = vmatprep.subr.bf16.mxu0 0
  %1213 = vmatpush1.bf16.msra.mxu0 0
  %1214 = vmatprep.subr.bf16.mxu0 0
  %1215 = vmatpush1.bf16.msra.mxu0 0
  %1216 = vmatprep.subr.bf16.mxu0 0
  %1217 = vmatpush1.bf16.msra.mxu0 0
  %1218 = vmatprep.subr.bf16.mxu0 0
  %1219 = vmatpush1.bf16.msra.mxu0 0
  %1220 = vmatprep.subr.bf16.mxu0 0
  %1221 = vmatpush1.bf16.msra.mxu0 0
  %1222 = vmatprep.subr.bf16.mxu0 0
  %1223 = vmatpush1.bf16.msra.mxu0 0
  %1224 = vmatprep.subr.bf16.mxu0 0
  %1225 = vmatpush1.bf16.msra.mxu0 0
  %1226 = vmatprep.subr.bf16.mxu0 0
  %1227 = vmatpush1.bf16.msra.mxu0 0
  %1228 = vmatprep.subr.bf16.mxu0 0
  %1229 = vmatpush1.bf16.msra.mxu0 0
  %1230 = vmatprep.subr.bf16.mxu0 0
  %1231 = vmatpush1.bf16.msra.mxu0 0
  %1232 = vmatprep.subr.bf16.mxu0 0
  %1233 = vmatpush1.bf16.msra.mxu0 0
  %1234 = vmatprep.subr.bf16.mxu0 0
  %1235 = vmatpush1.bf16.msra.mxu0 0
  %1236 = vmatprep.subr.bf16.mxu0 0
  %1237 = vmatpush1.bf16.msra.mxu0 0
  %1238 = vmatprep.mubr.bf16.mxu0 0
  %1239 = vmatmul.mubr.bf16.gmra.mrb[0].mxu0 %v1204
  %v1240 = vpop.f32.mrb[0].mxu0
  %v1241 = vadd.f32 0.0, %v1240
  %v1242 = vpop.f32.mrb[0].mxu0
  %v1243 = vpop.f32.mrb[0].mxu0
  %v1244 = vpop.f32.mrb[0].mxu0
  %1245 = vdwg.mxu0
  %v1246 = vld [vmem:[%s4 + $0xa0] sm:$0xf]
  %v1247 = vld [vmem:[%s4 + $0xa4] sm:$0xf]
  %v1248 = vld [vmem:[%s4 + $0xa8] sm:$0xf]
  %v1249 = vld [vmem:[%s4 + $0xac] sm:$0xf]
  %v1250 = vpack.c.bf16 %v1241, %v1241
  %v1255 = vunpack.c.l.b16 %v1246
  %v1256 = vunpack.c.l.b16 %v1247
  %v1257 = vunpack.c.l.b16 %v1248
  %v1258 = vunpack.c.l.b16 %v1249
  %v1259 = vpack.c.b16 %v1256, %v1255
  %v1260 = vpack.c.b16 %v1258, %v1257
  %v1264 = vsel %vm190, %v1250, 0
  %1266 = vmatprep.subr.bf16.mxu0 0
  %1267 = vmatpush1.bf16.msra.mxu0 %v1259
  %1268 = vmatprep.subr.bf16.mxu0 0
  %1269 = vmatpush1.bf16.msra.mxu0 %v1260
  %1270 = vmatprep.subr.bf16.mxu0 0
  %1271 = vmatpush1.bf16.msra.mxu0 0
  %1272 = vmatprep.subr.bf16.mxu0 0
  %1273 = vmatpush1.bf16.msra.mxu0 0
  %1274 = vmatprep.subr.bf16.mxu0 0
  %1275 = vmatpush1.bf16.msra.mxu0 0
  %1276 = vmatprep.subr.bf16.mxu0 0
  %1277 = vmatpush1.bf16.msra.mxu0 0
  %1278 = vmatprep.subr.bf16.mxu0 0
  %1279 = vmatpush1.bf16.msra.mxu0 0
  %1280 = vmatprep.subr.bf16.mxu0 0
  %1281 = vmatpush1.bf16.msra.mxu0 0
  %1282 = vmatprep.subr.bf16.mxu0 0
  %1283 = vmatpush1.bf16.msra.mxu0 0
  %1284 = vmatprep.subr.bf16.mxu0 0
  %1285 = vmatpush1.bf16.msra.mxu0 0
  %1286 = vmatprep.subr.bf16.mxu0 0
  %1287 = vmatpush1.bf16.msra.mxu0 0
  %1288 = vmatprep.subr.bf16.mxu0 0
  %1289 = vmatpush1.bf16.msra.mxu0 0
  %1290 = vmatprep.subr.bf16.mxu0 0
  %1291 = vmatpush1.bf16.msra.mxu0 0
  %1292 = vmatprep.subr.bf16.mxu0 0
  %1293 = vmatpush1.bf16.msra.mxu0 0
  %1294 = vmatprep.subr.bf16.mxu0 0
  %1295 = vmatpush1.bf16.msra.mxu0 0
  %1296 = vmatprep.subr.bf16.mxu0 0
  %1297 = vmatpush1.bf16.msra.mxu0 0
  %1298 = vmatprep.mubr.bf16.mxu0 0
  %1299 = vmatmul.mubr.bf16.gmra.mrb[0].mxu0 %v1264
  %v1300 = vpop.f32.mrb[0].mxu0
  %v1301 = vadd.f32 0.0, %v1300
  %v1302 = vpop.f32.mrb[0].mxu0
  %v1303 = vpop.f32.mrb[0].mxu0
  %v1304 = vpop.f32.mrb[0].mxu0
  %1305 = vdwg.mxu0
  %v1306 = vadd.f32 %v1195, %v1301
  %1307 = vset.pattern.permute.xlu0 3
  %1308 = vperm.xlu0 %1307, %v39
  %v1309 = vpop.permute.xlu0 %1308
  %vm1310 = vcmp.eq.s32.totalorder %v1309, %v49
  %v1311 = vsel %vm1310, 1, 0
  %v1312 = vcvt.s32.f32 %v1311
  %v1313 = vpack.c.bf16 %v1312, %v1312
  %v1315 = vsel %vm977, %v1313, 0
  %1317 = vmatprep.subr.bf16.mxu0 0
  %1318 = vmatpush1.bf16.msra.mxu0 %v972
  %1319 = vmatprep.subr.bf16.mxu0 0
  %1320 = vmatpush1.bf16.msra.mxu0 %v973
  %1321 = vmatprep.subr.bf16.mxu0 0
  %1322 = vmatpush1.bf16.msra.mxu0 %v982
  %1323 = vmatprep.subr.bf16.mxu0 0
  %1324 = vmatpush1.bf16.msra.mxu0 0
  %1325 = vmatprep.subr.bf16.mxu0 0
  %1326 = vmatpush1.bf16.msra.mxu0 0
  %1327 = vmatprep.subr.bf16.mxu0 0
  %1328 = vmatpush1.bf16.msra.mxu0 0
  %1329 = vmatprep.subr.bf16.mxu0 0
  %1330 = vmatpush1.bf16.msra.mxu0 0
  %1331 = vmatprep.subr.bf16.mxu0 0
  %1332 = vmatpush1.bf16.msra.mxu0 0
  %1333 = vmatprep.subr.bf16.mxu0 0
  %1334 = vmatpush1.bf16.msra.mxu0 0
  %1335 = vmatprep.subr.bf16.mxu0 0
  %1336 = vmatpush1.bf16.msra.mxu0 0
  %1337 = vmatprep.subr.bf16.mxu0 0
  %1338 = vmatpush1.bf16.msra.mxu0 0
  %1339 = vmatprep.subr.bf16.mxu0 0
  %1340 = vmatpush1.bf16.msra.mxu0 0
  %1341 = vmatprep.subr.bf16.mxu0 0
  %1342 = vmatpush1.bf16.msra.mxu0 0
  %1343 = vmatprep.subr.bf16.mxu0 0
  %1344 = vmatpush1.bf16.msra.mxu0 0
  %1345 = vmatprep.subr.bf16.mxu0 0
  %1346 = vmatpush1.bf16.msra.mxu0 0
  %1347 = vmatprep.subr.bf16.mxu0 0
  %1348 = vmatpush1.bf16.msra.mxu0 0
  %1349 = vmatprep.mubr.bf16.mxu0 0
  %1350 = vmatmul.mubr.bf16.gmra.mrb[0].mxu0 %v1315
  %v1351 = vpop.f32.mrb[0].mxu0
  %v1352 = vadd.f32 0.0, %v1351
  %v1353 = vpop.f32.mrb[0].mxu0
  %v1354 = vpop.f32.mrb[0].mxu0
  %v1355 = vpop.f32.mrb[0].mxu0
  %1356 = vdwg.mxu0
  %v1357 = vld [vmem:[%s4 + $0xb0] sm:$0xf]
  %v1358 = vld [vmem:[%s4 + $0xb4] sm:$0xf]
  %v1359 = vld [vmem:[%s4 + $0xb8] sm:$0xf]
  %v1360 = vld [vmem:[%s4 + $0xbc] sm:$0xf]
  %v1361 = vpack.c.bf16 %v1352, %v1352
  %v1366 = vunpack.c.l.b16 %v1357
  %v1367 = vunpack.c.l.b16 %v1358
  %v1368 = vunpack.c.l.b16 %v1359
  %v1369 = vunpack.c.l.b16 %v1360
  %v1370 = vpack.c.b16 %v1367, %v1366
  %v1371 = vpack.c.b16 %v1369, %v1368
  %v1375 = vsel %vm190, %v1361, 0
  %1377 = vmatprep.subr.bf16.mxu0 0
  %1378 = vmatpush1.bf16.msra.mxu0 %v1370
  %1379 = vmatprep.subr.bf16.mxu0 0
  %1380 = vmatpush1.bf16.msra.mxu0 %v1371
  %1381 = vmatprep.subr.bf16.mxu0 0
  %1382 = vmatpush1.bf16.msra.mxu0 0
  %1383 = vmatprep.subr.bf16.mxu0 0
  %1384 = vmatpush1.bf16.msra.mxu0 0
  %1385 = vmatprep.subr.bf16.mxu0 0
  %1386 = vmatpush1.bf16.msra.mxu0 0
  %1387 = vmatprep.subr.bf16.mxu0 0
  %1388 = vmatpush1.bf16.msra.mxu0 0
  %1389 = vmatprep.subr.bf16.mxu0 0
  %1390 = vmatpush1.bf16.msra.mxu0 0
  %1391 = vmatprep.subr.bf16.mxu0 0
  %1392 = vmatpush1.bf16.msra.mxu0 0
  %1393 = vmatprep.subr.bf16.mxu0 0
  %1394 = vmatpush1.bf16.msra.mxu0 0
  %1395 = vmatprep.subr.bf16.mxu0 0
  %1396 = vmatpush1.bf16.msra.mxu0 0
  %1397 = vmatprep.subr.bf16.mxu0 0
  %1398 = vmatpush1.bf16.msra.mxu0 0
  %1399 = vmatprep.subr.bf16.mxu0 0
  %1400 = vmatpush1.bf16.msra.mxu0 0
  %1401 = vmatprep.subr.bf16.mxu0 0
  %1402 = vmatpush1.bf16.msra.mxu0 0
  %1403 = vmatprep.subr.bf16.mxu0 0
  %1404 = vmatpush1.bf16.msra.mxu0 0
  %1405 = vmatprep.subr.bf16.mxu0 0
  %1406 = vmatpush1.bf16.msra.mxu0 0
  %1407 = vmatprep.subr.bf16.mxu0 0
  %1408 = vmatpush1.bf16.msra.mxu0 0
  %1409 = vmatprep.mubr.bf16.mxu0 0
  %1410 = vmatmul.mubr.bf16.gmra.mrb[0].mxu0 %v1375
  %v1411 = vpop.f32.mrb[0].mxu0
  %v1412 = vadd.f32 0.0, %v1411
  %v1413 = vpop.f32.mrb[0].mxu0
  %v1414 = vpop.f32.mrb[0].mxu0
  %v1415 = vpop.f32.mrb[0].mxu0
  %1416 = vdwg.mxu0
  %v1417 = vadd.f32 %v1306, %v1412
  %1418 = vset.pattern.permute.xlu0 4
  %1419 = vperm.xlu0 %1418, %v39
  %v1420 = vpop.permute.xlu0 %1419
  %vm1421 = vcmp.eq.s32.totalorder %v1420, %v49
  %v1422 = vsel %vm1421, 1, 0
  %v1423 = vcvt.s32.f32 %v1422
  %v1424 = vpack.c.bf16 %v1423, %v1423
  %v1426 = vsel %vm977, %v1424, 0
  %1428 = vmatprep.subr.bf16.mxu0 0
  %1429 = vmatpush1.bf16.msra.mxu0 %v972
  %1430 = vmatprep.subr.bf16.mxu0 0
  %1431 = vmatpush1.bf16.msra.mxu0 %v973
  %1432 = vmatprep.subr.bf16.mxu0 0
  %1433 = vmatpush1.bf16.msra.mxu0 %v982
  %1434 = vmatprep.subr.bf16.mxu0 0
  %1435 = vmatpush1.bf16.msra.mxu0 0
  %1436 = vmatprep.subr.bf16.mxu0 0
  %1437 = vmatpush1.bf16.msra.mxu0 0
  %1438 = vmatprep.subr.bf16.mxu0 0
  %1439 = vmatpush1.bf16.msra.mxu0 0
  %1440 = vmatprep.subr.bf16.mxu0 0
  %1441 = vmatpush1.bf16.msra.mxu0 0
  %1442 = vmatprep.subr.bf16.mxu0 0
  %1443 = vmatpush1.bf16.msra.mxu0 0
  %1444 = vmatprep.subr.bf16.mxu0 0
  %1445 = vmatpush1.bf16.msra.mxu0 0
  %1446 = vmatprep.subr.bf16.mxu0 0
  %1447 = vmatpush1.bf16.msra.mxu0 0
  %1448 = vmatprep.subr.bf16.mxu0 0
  %1449 = vmatpush1.bf16.msra.mxu0 0
  %1450 = vmatprep.subr.bf16.mxu0 0
  %1451 = vmatpush1.bf16.msra.mxu0 0
  %1452 = vmatprep.subr.bf16.mxu0 0
  %1453 = vmatpush1.bf16.msra.mxu0 0
  %1454 = vmatprep.subr.bf16.mxu0 0
  %1455 = vmatpush1.bf16.msra.mxu0 0
  %1456 = vmatprep.subr.bf16.mxu0 0
  %1457 = vmatpush1.bf16.msra.mxu0 0
  %1458 = vmatprep.subr.bf16.mxu0 0
  %1459 = vmatpush1.bf16.msra.mxu0 0
  %1460 = vmatprep.mubr.bf16.mxu0 0
  %1461 = vmatmul.mubr.bf16.gmra.mrb[0].mxu0 %v1426
  %v1462 = vpop.f32.mrb[0].mxu0
  %v1463 = vadd.f32 0.0, %v1462
  %v1464 = vpop.f32.mrb[0].mxu0
  %v1465 = vpop.f32.mrb[0].mxu0
  %v1466 = vpop.f32.mrb[0].mxu0
  %1467 = vdwg.mxu0
  %v1468 = vld [vmem:[%s4 + $0xc0] sm:$0xf]
  %v1469 = vld [vmem:[%s4 + $0xc4] sm:$0xf]
  %v1470 = vld [vmem:[%s4 + $0xc8] sm:$0xf]
  %v1471 = vld [vmem:[%s4 + $0xcc] sm:$0xf]
  %v1472 = vpack.c.bf16 %v1463, %v1463
  %v1477 = vunpack.c.l.b16 %v1468
  %v1478 = vunpack.c.l.b16 %v1469
  %v1479 = vunpack.c.l.b16 %v1470
  %v1480 = vunpack.c.l.b16 %v1471
  %v1481 = vpack.c.b16 %v1478, %v1477
  %v1482 = vpack.c.b16 %v1480, %v1479
  %v1486 = vsel %vm190, %v1472, 0
  %1488 = vmatprep.subr.bf16.mxu0 0
  %1489 = vmatpush1.bf16.msra.mxu0 %v1481
  %1490 = vmatprep.subr.bf16.mxu0 0
  %1491 = vmatpush1.bf16.msra.mxu0 %v1482
  %1492 = vmatprep.subr.bf16.mxu0 0
  %1493 = vmatpush1.bf16.msra.mxu0 0
  %1494 = vmatprep.subr.bf16.mxu0 0
  %1495 = vmatpush1.bf16.msra.mxu0 0
  %1496 = vmatprep.subr.bf16.mxu0 0
  %1497 = vmatpush1.bf16.msra.mxu0 0
  %1498 = vmatprep.subr.bf16.mxu0 0
  %1499 = vmatpush1.bf16.msra.mxu0 0
  %1500 = vmatprep.subr.bf16.mxu0 0
  %1501 = vmatpush1.bf16.msra.mxu0 0
  %1502 = vmatprep.subr.bf16.mxu0 0
  %1503 = vmatpush1.bf16.msra.mxu0 0
  %1504 = vmatprep.subr.bf16.mxu0 0
  %1505 = vmatpush1.bf16.msra.mxu0 0
  %1506 = vmatprep.subr.bf16.mxu0 0
  %1507 = vmatpush1.bf16.msra.mxu0 0
  %1508 = vmatprep.subr.bf16.mxu0 0
  %1509 = vmatpush1.bf16.msra.mxu0 0
  %1510 = vmatprep.subr.bf16.mxu0 0
  %1511 = vmatpush1.bf16.msra.mxu0 0
  %1512 = vmatprep.subr.bf16.mxu0 0
  %1513 = vmatpush1.bf16.msra.mxu0 0
  %1514 = vmatprep.subr.bf16.mxu0 0
  %1515 = vmatpush1.bf16.msra.mxu0 0
  %1516 = vmatprep.subr.bf16.mxu0 0
  %1517 = vmatpush1.bf16.msra.mxu0 0
  %1518 = vmatprep.subr.bf16.mxu0 0
  %1519 = vmatpush1.bf16.msra.mxu0 0
  %1520 = vmatprep.mubr.bf16.mxu0 0
  %1521 = vmatmul.mubr.bf16.gmra.mrb[0].mxu0 %v1486
  %v1522 = vpop.f32.mrb[0].mxu0
  %v1523 = vadd.f32 0.0, %v1522
  %v1524 = vpop.f32.mrb[0].mxu0
  %v1525 = vpop.f32.mrb[0].mxu0
  %v1526 = vpop.f32.mrb[0].mxu0
  %1527 = vdwg.mxu0
  %v1528 = vadd.f32 %v1417, %v1523
  %1529 = vset.pattern.permute.xlu0 5
  %1530 = vperm.xlu0 %1529, %v39
  %v1531 = vpop.permute.xlu0 %1530
  %vm1532 = vcmp.eq.s32.totalorder %v1531, %v49
  %v1533 = vsel %vm1532, 1, 0
  %v1534 = vcvt.s32.f32 %v1533
  %v1535 = vpack.c.bf16 %v1534, %v1534
  %v1537 = vsel %vm977, %v1535, 0
  %1539 = vmatprep.subr.bf16.mxu0 0
  %1540 = vmatpush1.bf16.msra.mxu0 %v972
  %1541 = vmatprep.subr.bf16.mxu0 0
  %1542 = vmatpush1.bf16.msra.mxu0 %v973
  %1543 = vmatprep.subr.bf16.mxu0 0
  %1544 = vmatpush1.bf16.msra.mxu0 %v982
  %1545 = vmatprep.subr.bf16.mxu0 0
  %1546 = vmatpush1.bf16.msra.mxu0 0
  %1547 = vmatprep.subr.bf16.mxu0 0
  %1548 = vmatpush1.bf16.msra.mxu0 0
  %1549 = vmatprep.subr.bf16.mxu0 0
  %1550 = vmatpush1.bf16.msra.mxu0 0
  %1551 = vmatprep.subr.bf16.mxu0 0
  %1552 = vmatpush1.bf16.msra.mxu0 0
  %1553 = vmatprep.subr.bf16.mxu0 0
  %1554 = vmatpush1.bf16.msra.mxu0 0
  %1555 = vmatprep.subr.bf16.mxu0 0
  %1556 = vmatpush1.bf16.msra.mxu0 0
  %1557 = vmatprep.subr.bf16.mxu0 0
  %1558 = vmatpush1.bf16.msra.mxu0 0
  %1559 = vmatprep.subr.bf16.mxu0 0
  %1560 = vmatpush1.bf16.msra.mxu0 0
  %1561 = vmatprep.subr.bf16.mxu0 0
  %1562 = vmatpush1.bf16.msra.mxu0 0
  %1563 = vmatprep.subr.bf16.mxu0 0
  %1564 = vmatpush1.bf16.msra.mxu0 0
  %1565 = vmatprep.subr.bf16.mxu0 0
  %1566 = vmatpush1.bf16.msra.mxu0 0
  %1567 = vmatprep.subr.bf16.mxu0 0
  %1568 = vmatpush1.bf16.msra.mxu0 0
  %1569 = vmatprep.subr.bf16.mxu0 0
  %1570 = vmatpush1.bf16.msra.mxu0 0
  %1571 = vmatprep.mubr.bf16.mxu0 0
  %1572 = vmatmul.mubr.bf16.gmra.mrb[0].mxu0 %v1537
  %v1573 = vpop.f32.mrb[0].mxu0
  %v1574 = vadd.f32 0.0, %v1573
  %v1575 = vpop.f32.mrb[0].mxu0
  %v1576 = vpop.f32.mrb[0].mxu0
  %v1577 = vpop.f32.mrb[0].mxu0
  %1578 = vdwg.mxu0
  %v1579 = vld [vmem:[%s4 + $0xd0] sm:$0xf]
  %v1580 = vld [vmem:[%s4 + $0xd4] sm:$0xf]
  %v1581 = vld [vmem:[%s4 + $0xd8] sm:$0xf]
  %v1582 = vld [vmem:[%s4 + $0xdc] sm:$0xf]
  %v1583 = vpack.c.bf16 %v1574, %v1574
  %v1588 = vunpack.c.l.b16 %v1579
  %v1589 = vunpack.c.l.b16 %v1580
  %v1590 = vunpack.c.l.b16 %v1581
  %v1591 = vunpack.c.l.b16 %v1582
  %v1592 = vpack.c.b16 %v1589, %v1588
  %v1593 = vpack.c.b16 %v1591, %v1590
  %v1597 = vsel %vm190, %v1583, 0
  %1599 = vmatprep.subr.bf16.mxu0 0
  %1600 = vmatpush1.bf16.msra.mxu0 %v1592
  %1601 = vmatprep.subr.bf16.mxu0 0
  %1602 = vmatpush1.bf16.msra.mxu0 %v1593
  %1603 = vmatprep.subr.bf16.mxu0 0
  %1604 = vmatpush1.bf16.msra.mxu0 0
  %1605 = vmatprep.subr.bf16.mxu0 0
  %1606 = vmatpush1.bf16.msra.mxu0 0
  %1607 = vmatprep.subr.bf16.mxu0 0
  %1608 = vmatpush1.bf16.msra.mxu0 0
  %1609 = vmatprep.subr.bf16.mxu0 0
  %1610 = vmatpush1.bf16.msra.mxu0 0
  %1611 = vmatprep.subr.bf16.mxu0 0
  %1612 = vmatpush1.bf16.msra.mxu0 0
  %1613 = vmatprep.subr.bf16.mxu0 0
  %1614 = vmatpush1.bf16.msra.mxu0 0
  %1615 = vmatprep.subr.bf16.mxu0 0
  %1616 = vmatpush1.bf16.msra.mxu0 0
  %1617 = vmatprep.subr.bf16.mxu0 0
  %1618 = vmatpush1.bf16.msra.mxu0 0
  %1619 = vmatprep.subr.bf16.mxu0 0
  %1620 = vmatpush1.bf16.msra.mxu0 0
  %1621 = vmatprep.subr.bf16.mxu0 0
  %1622 = vmatpush1.bf16.msra.mxu0 0
  %1623 = vmatprep.subr.bf16.mxu0 0
  %1624 = vmatpush1.bf16.msra.mxu0 0
  %1625 = vmatprep.subr.bf16.mxu0 0
  %1626 = vmatpush1.bf16.msra.mxu0 0
  %1627 = vmatprep.subr.bf16.mxu0 0
  %1628 = vmatpush1.bf16.msra.mxu0 0
  %1629 = vmatprep.subr.bf16.mxu0 0
  %1630 = vmatpush1.bf16.msra.mxu0 0
  %1631 = vmatprep.mubr.bf16.mxu0 0
  %1632 = vmatmul.mubr.bf16.gmra.mrb[0].mxu0 %v1597
  %v1633 = vpop.f32.mrb[0].mxu0
  %v1634 = vadd.f32 0.0, %v1633
  %v1635 = vpop.f32.mrb[0].mxu0
  %v1636 = vpop.f32.mrb[0].mxu0
  %v1637 = vpop.f32.mrb[0].mxu0
  %1638 = vdwg.mxu0
  %v1639 = vadd.f32 %v1528, %v1634
  %1640 = vset.pattern.permute.xlu0 6
  %1641 = vperm.xlu0 %1640, %v39
  %v1642 = vpop.permute.xlu0 %1641
  %vm1643 = vcmp.eq.s32.totalorder %v1642, %v49
  %v1644 = vsel %vm1643, 1, 0
  %v1645 = vcvt.s32.f32 %v1644
  %v1646 = vpack.c.bf16 %v1645, %v1645
  %v1648 = vsel %vm977, %v1646, 0
  %1650 = vmatprep.subr.bf16.mxu0 0
  %1651 = vmatpush1.bf16.msra.mxu0 %v972
  %1652 = vmatprep.subr.bf16.mxu0 0
  %1653 = vmatpush1.bf16.msra.mxu0 %v973
  %1654 = vmatprep.subr.bf16.mxu0 0
  %1655 = vmatpush1.bf16.msra.mxu0 %v982
  %1656 = vmatprep.subr.bf16.mxu0 0
  %1657 = vmatpush1.bf16.msra.mxu0 0
  %1658 = vmatprep.subr.bf16.mxu0 0
  %1659 = vmatpush1.bf16.msra.mxu0 0
  %1660 = vmatprep.subr.bf16.mxu0 0
  %1661 = vmatpush1.bf16.msra.mxu0 0
  %1662 = vmatprep.subr.bf16.mxu0 0
  %1663 = vmatpush1.bf16.msra.mxu0 0
  %1664 = vmatprep.subr.bf16.mxu0 0
  %1665 = vmatpush1.bf16.msra.mxu0 0
  %1666 = vmatprep.subr.bf16.mxu0 0
  %1667 = vmatpush1.bf16.msra.mxu0 0
  %1668 = vmatprep.subr.bf16.mxu0 0
  %1669 = vmatpush1.bf16.msra.mxu0 0
  %1670 = vmatprep.subr.bf16.mxu0 0
  %1671 = vmatpush1.bf16.msra.mxu0 0
  %1672 = vmatprep.subr.bf16.mxu0 0
  %1673 = vmatpush1.bf16.msra.mxu0 0
  %1674 = vmatprep.subr.bf16.mxu0 0
  %1675 = vmatpush1.bf16.msra.mxu0 0
  %1676 = vmatprep.subr.bf16.mxu0 0
  %1677 = vmatpush1.bf16.msra.mxu0 0
  %1678 = vmatprep.subr.bf16.mxu0 0
  %1679 = vmatpush1.bf16.msra.mxu0 0
  %1680 = vmatprep.subr.bf16.mxu0 0
  %1681 = vmatpush1.bf16.msra.mxu0 0
  %1682 = vmatprep.mubr.bf16.mxu0 0
  %1683 = vmatmul.mubr.bf16.gmra.mrb[0].mxu0 %v1648
  %v1684 = vpop.f32.mrb[0].mxu0
  %v1685 = vadd.f32 0.0, %v1684
  %v1686 = vpop.f32.mrb[0].mxu0
  %v1687 = vpop.f32.mrb[0].mxu0
  %v1688 = vpop.f32.mrb[0].mxu0
  %1689 = vdwg.mxu0
  %v1690 = vld [vmem:[%s4 + $0xe0] sm:$0xf]
  %v1691 = vld [vmem:[%s4 + $0xe4] sm:$0xf]
  %v1692 = vld [vmem:[%s4 + $0xe8] sm:$0xf]
  %v1693 = vld [vmem:[%s4 + $0xec] sm:$0xf]
  %v1694 = vpack.c.bf16 %v1685, %v1685
  %v1699 = vunpack.c.l.b16 %v1690
  %v1700 = vunpack.c.l.b16 %v1691
  %v1701 = vunpack.c.l.b16 %v1692
  %v1702 = vunpack.c.l.b16 %v1693
  %v1703 = vpack.c.b16 %v1700, %v1699
  %v1704 = vpack.c.b16 %v1702, %v1701
  %v1708 = vsel %vm190, %v1694, 0
  %1710 = vmatprep.subr.bf16.mxu0 0
  %1711 = vmatpush1.bf16.msra.mxu0 %v1703
  %1712 = vmatprep.subr.bf16.mxu0 0
  %1713 = vmatpush1.bf16.msra.mxu0 %v1704
  %1714 = vmatprep.subr.bf16.mxu0 0
  %1715 = vmatpush1.bf16.msra.mxu0 0
  %1716 = vmatprep.subr.bf16.mxu0 0
  %1717 = vmatpush1.bf16.msra.mxu0 0
  %1718 = vmatprep.subr.bf16.mxu0 0
  %1719 = vmatpush1.bf16.msra.mxu0 0
  %1720 = vmatprep.subr.bf16.mxu0 0
  %1721 = vmatpush1.bf16.msra.mxu0 0
  %1722 = vmatprep.subr.bf16.mxu0 0
  %1723 = vmatpush1.bf16.msra.mxu0 0
  %1724 = vmatprep.subr.bf16.mxu0 0
  %1725 = vmatpush1.bf16.msra.mxu0 0
  %1726 = vmatprep.subr.bf16.mxu0 0
  %1727 = vmatpush1.bf16.msra.mxu0 0
  %1728 = vmatprep.subr.bf16.mxu0 0
  %1729 = vmatpush1.bf16.msra.mxu0 0
  %1730 = vmatprep.subr.bf16.mxu0 0
  %1731 = vmatpush1.bf16.msra.mxu0 0
  %1732 = vmatprep.subr.bf16.mxu0 0
  %1733 = vmatpush1.bf16.msra.mxu0 0
  %1734 = vmatprep.subr.bf16.mxu0 0
  %1735 = vmatpush1.bf16.msra.mxu0 0
  %1736 = vmatprep.subr.bf16.mxu0 0
  %1737 = vmatpush1.bf16.msra.mxu0 0
  %1738 = vmatprep.subr.bf16.mxu0 0
  %1739 = vmatpush1.bf16.msra.mxu0 0
  %1740 = vmatprep.subr.bf16.mxu0 0
  %1741 = vmatpush1.bf16.msra.mxu0 0
  %1742 = vmatprep.mubr.bf16.mxu0 0
  %1743 = vmatmul.mubr.bf16.gmra.mrb[0].mxu0 %v1708
  %v1744 = vpop.f32.mrb[0].mxu0
  %v1745 = vadd.f32 0.0, %v1744
  %v1746 = vpop.f32.mrb[0].mxu0
  %v1747 = vpop.f32.mrb[0].mxu0
  %v1748 = vpop.f32.mrb[0].mxu0
  %1749 = vdwg.mxu0
  %v1750 = vadd.f32 %v1639, %v1745
  %1751 = vset.pattern.permute.xlu0 7
  %1752 = vperm.xlu0 %1751, %v39
  %v1753 = vpop.permute.xlu0 %1752
  %vm1754 = vcmp.eq.s32.totalorder %v1753, %v49
  %v1755 = vsel %vm1754, 1, 0
  %v1756 = vcvt.s32.f32 %v1755
  %v1757 = vpack.c.bf16 %v1756, %v1756
  %v1759 = vsel %vm977, %v1757, 0
  %1761 = vmatprep.subr.bf16.mxu0 0
  %1762 = vmatpush1.bf16.msra.mxu0 %v972
  %1763 = vmatprep.subr.bf16.mxu0 0
  %1764 = vmatpush1.bf16.msra.mxu0 %v973
  %1765 = vmatprep.subr.bf16.mxu0 0
  %1766 = vmatpush1.bf16.msra.mxu0 %v982
  %1767 = vmatprep.subr.bf16.mxu0 0
  %1768 = vmatpush1.bf16.msra.mxu0 0
  %1769 = vmatprep.subr.bf16.mxu0 0
  %1770 = vmatpush1.bf16.msra.mxu0 0
  %1771 = vmatprep.subr.bf16.mxu0 0
  %1772 = vmatpush1.bf16.msra.mxu0 0
  %1773 = vmatprep.subr.bf16.mxu0 0
  %1774 = vmatpush1.bf16.msra.mxu0 0
  %1775 = vmatprep.subr.bf16.mxu0 0
  %1776 = vmatpush1.bf16.msra.mxu0 0
  %1777 = vmatprep.subr.bf16.mxu0 0
  %1778 = vmatpush1.bf16.msra.mxu0 0
  %1779 = vmatprep.subr.bf16.mxu0 0
  %1780 = vmatpush1.bf16.msra.mxu0 0
  %1781 = vmatprep.subr.bf16.mxu0 0
  %1782 = vmatpush1.bf16.msra.mxu0 0
  %1783 = vmatprep.subr.bf16.mxu0 0
  %1784 = vmatpush1.bf16.msra.mxu0 0
  %1785 = vmatprep.subr.bf16.mxu0 0
  %1786 = vmatpush1.bf16.msra.mxu0 0
  %1787 = vmatprep.subr.bf16.mxu0 0
  %1788 = vmatpush1.bf16.msra.mxu0 0
  %1789 = vmatprep.subr.bf16.mxu0 0
  %1790 = vmatpush1.bf16.msra.mxu0 0
  %1791 = vmatprep.subr.bf16.mxu0 0
  %1792 = vmatpush1.bf16.msra.mxu0 0
  %1793 = vmatprep.mubr.bf16.mxu0 0
  %1794 = vmatmul.mubr.bf16.gmra.mrb[0].mxu0 %v1759
  %v1795 = vpop.f32.mrb[0].mxu0
  %v1796 = vadd.f32 0.0, %v1795
  %v1797 = vpop.f32.mrb[0].mxu0
  %v1798 = vpop.f32.mrb[0].mxu0
  %v1799 = vpop.f32.mrb[0].mxu0
  %1800 = vdwg.mxu0
  %v1801 = vld [vmem:[%s4 + $0xf0] sm:$0xf]
  %v1802 = vld [vmem:[%s4 + $0xf4] sm:$0xf]
  %v1803 = vld [vmem:[%s4 + $0xf8] sm:$0xf]
  %v1804 = vld [vmem:[%s4 + $0xfc] sm:$0xf]
  %v1805 = vpack.c.bf16 %v1796, %v1796
  %v1810 = vunpack.c.l.b16 %v1801
  %v1811 = vunpack.c.l.b16 %v1802
  %v1812 = vunpack.c.l.b16 %v1803
  %v1813 = vunpack.c.l.b16 %v1804
  %v1814 = vpack.c.b16 %v1811, %v1810
  %v1815 = vpack.c.b16 %v1813, %v1812
  %v1819 = vsel %vm190, %v1805, 0
  %1821 = vmatprep.subr.bf16.mxu0 0
  %1822 = vmatpush1.bf16.msra.mxu0 %v1814
  %1823 = vmatprep.subr.bf16.mxu0 0
  %1824 = vmatpush1.bf16.msra.mxu0 %v1815
  %1825 = vmatprep.subr.bf16.mxu0 0
  %1826 = vmatpush1.bf16.msra.mxu0 0
  %1827 = vmatprep.subr.bf16.mxu0 0
  %1828 = vmatpush1.bf16.msra.mxu0 0
  %1829 = vmatprep.subr.bf16.mxu0 0
  %1830 = vmatpush1.bf16.msra.mxu0 0
  %1831 = vmatprep.subr.bf16.mxu0 0
  %1832 = vmatpush1.bf16.msra.mxu0 0
  %1833 = vmatprep.subr.bf16.mxu0 0
  %1834 = vmatpush1.bf16.msra.mxu0 0
  %1835 = vmatprep.subr.bf16.mxu0 0
  %1836 = vmatpush1.bf16.msra.mxu0 0
  %1837 = vmatprep.subr.bf16.mxu0 0
  %1838 = vmatpush1.bf16.msra.mxu0 0
  %1839 = vmatprep.subr.bf16.mxu0 0
  %1840 = vmatpush1.bf16.msra.mxu0 0
  %1841 = vmatprep.subr.bf16.mxu0 0
  %1842 = vmatpush1.bf16.msra.mxu0 0
  %1843 = vmatprep.subr.bf16.mxu0 0
  %1844 = vmatpush1.bf16.msra.mxu0 0
  %1845 = vmatprep.subr.bf16.mxu0 0
  %1846 = vmatpush1.bf16.msra.mxu0 0
  %1847 = vmatprep.subr.bf16.mxu0 0
  %1848 = vmatpush1.bf16.msra.mxu0 0
  %1849 = vmatprep.subr.bf16.mxu0 0
  %1850 = vmatpush1.bf16.msra.mxu0 0
  %1851 = vmatprep.subr.bf16.mxu0 0
  %1852 = vmatpush1.bf16.msra.mxu0 0
  %1853 = vmatprep.mubr.bf16.mxu0 0
  %1854 = vmatmul.mubr.bf16.gmra.mrb[0].mxu0 %v1819
  %v1855 = vpop.f32.mrb[0].mxu0
  %v1856 = vadd.f32 0.0, %v1855
  %v1857 = vpop.f32.mrb[0].mxu0
  %v1858 = vpop.f32.mrb[0].mxu0
  %v1859 = vpop.f32.mrb[0].mxu0
  %1860 = vdwg.mxu0
  %v1861 = vadd.f32 %v1750, %v1856
  %v1863 = vlaneseq
  %v1864 = vshrl.u32 %v1863, 7
  %v1865 = vsub.s32 0, %v1864
  %v1866 = vrot.slane %v50, %v1865
  %v1868 = vadd.f32 %v1861, %v1866
  %v1869 = vmax.f32 %v1868, 0.0
  %v1870 = vpack.c.bf16 %v1869, %v1869
  %v1871 = vld [vmem:[%s6] sm:$0xf]
  %v1872 = vld [vmem:[%s6 + $0x4] sm:$0xf]
  %v1873 = vld [vmem:[%s6 + $0x8] sm:$0xf]
  %v1874 = vld [vmem:[%s6 + $0xc] sm:$0xf]
  %v1875 = vld [vmem:[%s6 + $0x10] sm:$0xf]
  %v1876 = vld [vmem:[%s6 + $0x14] sm:$0xf]
  %v1877 = vld [vmem:[%s6 + $0x18] sm:$0xf]
  %v1878 = vld [vmem:[%s6 + $0x1c] sm:$0xf]
  %v1880 = vlaneseq
  %v1881 = vshrl.u32 %v1880, 7
  %v1882 = vsub.s32 0, %v1881
  %v1883 = vrot.slane %v51, %v1882
  %v1893 = vunpack.c.l.b16 %v1871
  %v1894 = vunpack.c.l.b16 %v1872
  %v1895 = vunpack.c.l.b16 %v1873
  %v1896 = vunpack.c.l.b16 %v1874
  %v1897 = vunpack.c.l.b16 %v1875
  %v1898 = vunpack.c.l.b16 %v1876
  %v1899 = vunpack.c.l.b16 %v1877
  %v1900 = vunpack.c.l.b16 %v1878
  %v1901 = vpack.c.b16 %v1894, %v1893
  %v1902 = vpack.c.b16 %v1896, %v1895
  %v1903 = vpack.c.b16 %v1898, %v1897
  %v1904 = vpack.c.b16 %v1900, %v1899
  %vm1909 = vcmask 523264
  %v1911 = vsel %vm1909, %v1870, 0
  %1913 = vmatprep.subr.bf16.mxu0 0
  %1914 = vmatpush1.bf16.msra.mxu0 %v1901
  %1915 = vmatprep.subr.bf16.mxu0 0
  %1916 = vmatpush1.bf16.msra.mxu0 %v1902
  %1917 = vmatprep.subr.bf16.mxu0 0
  %1918 = vmatpush1.bf16.msra.mxu0 %v1903
  %1919 = vmatprep.subr.bf16.mxu0 0
  %1920 = vmatpush1.bf16.msra.mxu0 %v1904
  %1921 = vmatprep.subr.bf16.mxu0 0
  %1922 = vmatpush1.bf16.msra.mxu0 0
  %1923 = vmatprep.subr.bf16.mxu0 0
  %1924 = vmatpush1.bf16.msra.mxu0 0
  %1925 = vmatprep.subr.bf16.mxu0 0
  %1926 = vmatpush1.bf16.msra.mxu0 0
  %1927 = vmatprep.subr.bf16.mxu0 0
  %1928 = vmatpush1.bf16.msra.mxu0 0
  %1929 = vmatprep.subr.bf16.mxu0 0
  %1930 = vmatpush1.bf16.msra.mxu0 0
  %1931 = vmatprep.subr.bf16.mxu0 0
  %1932 = vmatpush1.bf16.msra.mxu0 0
  %1933 = vmatprep.subr.bf16.mxu0 0
  %1934 = vmatpush1.bf16.msra.mxu0 0
  %1935 = vmatprep.subr.bf16.mxu0 0
  %1936 = vmatpush1.bf16.msra.mxu0 0
  %1937 = vmatprep.subr.bf16.mxu0 0
  %1938 = vmatpush1.bf16.msra.mxu0 0
  %1939 = vmatprep.subr.bf16.mxu0 0
  %1940 = vmatpush1.bf16.msra.mxu0 0
  %1941 = vmatprep.subr.bf16.mxu0 0
  %1942 = vmatpush1.bf16.msra.mxu0 0
  %1943 = vmatprep.subr.bf16.mxu0 0
  %1944 = vmatpush1.bf16.msra.mxu0 0
  %1945 = vmatprep.mubr.bf16.mxu0 0
  %1946 = vmatmul.mubr.bf16.gmra.mrb[0].mxu0 %v1911
  %v1947 = vpop.f32.mrb[0].mxu0
  %v1948 = vadd.f32 %v1883, %v1947
  %v1949 = vpop.f32.mrb[0].mxu0
  %v1950 = vpop.f32.mrb[0].mxu0
  %v1951 = vpop.f32.mrb[0].mxu0
  %1952 = vdwg.mxu0
  %v1953 = vmax.f32 %v1948, 0.0
  %v1955 = vlaneseq
  %v1956 = vshrl.u32 %v1955, 7
  %v1957 = vsub.s32 0, %v1956
  %v1958 = vrot.slane %v52, %v1957
  %v1960 = vmul.f32 %v1953, %v1958
  %v1961 = vsel %vm190, %v1960, 0.0
  %1962 = vadd.xlane.f32.xlu0 %v1961
  %v1963 = vpop.xlane.xlu0 %1962
  %v1965 = vlaneseq
  %v1966 = vshrl.u32 %v1965, 7
  %v1967 = vsub.s32 0, %v1966
  %v1968 = vrot.slane %v53, %v1967
  %v1970 = vadd.f32 %v1963, %v1968
  %v1971 = vxor.u32 %v1970, 2147483648
  %v1972 = vmul.f32 %v1971, 1.442695
  %v1973 = vpow.pop %v1972
  %v1974 = vadd.f32 %v1973, 1.0
  %v1975 = vrcp.pop %v1974
  %v1976 = vmul.f32 1.0, %v1975
  %vm1977 = vcmask 7168
  %1978 = vst.msk [vmem:[%s10] sm:$0xff] %vm1977, %v1976
  // Predicated region
  $region42: #{dnn_forward.1} parent=0 // pred_check
    _
  $region43: #{dnn_forward.1} parent=0 // pred_check_branch
    %1980 = sbr.rel (0) target = $region45
  $region44: #{dnn_forward.1} parent=0 // pred_region
    _
  $region45: #{dnn_forward.1} parent=0 // pred_fallthru
    _
  // Predicated region
  $region46: #{dnn_forward.1} parent=0 // pred_check
    _
  $region47: #{dnn_forward.1} parent=0 // pred_check_branch
    %1982 = sbr.rel (0) target = $region49
  $region48: #{dnn_forward.1} parent=0 // pred_region
    _
  $region49: #{dnn_forward.1} parent=0 // pred_fallthru
    _

</llo_original>
